<compile_context>
chip_gen: v5e
topology: v5e:2x2
jax: 0.10.0
libtpu: 0.0.40
codegen_flags: <defaults>
</compile_context>

<pallas_src>
import jax
import jax.numpy as jnp
from jax.experimental import pallas as pl
from jax.experimental.pallas import tpu as pltpu

EPS = 1e-5  # nn.BatchNorm3d default eps


def _round_up(x, m):
    return (x + m - 1) // m * m


# ----------------------------- Pallas kernels ------------------------------

def _conv_stats_kernel(p_ref, w_ref, z_ref, stats_ref):
    # p:     (1, TN, Kp)  bf16 im2col patch rows (zero-padded rows / K)
    # w:     (1, Kp, 32)  bf16 conv weights for this path
    # z:     (1, TN, 32)  f32 conv outputs
    # stats: (1, 1, 2, 32) f32 per-channel partial [sum ; sum of squares]
    z = jnp.dot(p_ref[0], w_ref[0], preferred_element_type=jnp.float32)
    z_ref[0] = z
    # Padded (all-zero) patch rows contribute exactly 0 to both partial sums;
    # the wrapper divides by the true row count.
    stats_ref[0, 0, 0:1, :] = jnp.sum(z, axis=0, keepdims=True)
    stats_ref[0, 0, 1:2, :] = jnp.sum(z * z, axis=0, keepdims=True)


def _bn_relu_pool_kernel(z_ref, scale_ref, shift_ref, o_ref):
    # z:     (1, S_pool, 8, 32) conv outputs grouped by 2x2x2 pooling window
    # scale: (1, 32)  gamma / sqrt(var + eps)
    # shift: (1, 32)  beta - mean * scale
    # o:     (1, S_pool, 32) pooled activations
    sc = scale_ref[...]
    sh = shift_ref[...]
    # Affine (BN) per window element, then max over the 2x2x2 window, then
    # ReLU (ReLU commutes with max).
    m = z_ref[0, :, 0, :] * sc + sh
    for k in range(1, 8):
        m = jnp.maximum(m, z_ref[0, :, k, :] * sc + sh)
    o_ref[0] = jnp.maximum(m, 0.0)


def _fc_kernel(x_ref, w_ref, b_ref, o_ref):
    o_ref[...] = jnp.dot(x_ref[...], w_ref[...],
                         preferred_element_type=jnp.float32) + b_ref[...]


# ------------------------------ kernel wrappers -----------------------------

def conv_matmul_stats(patches, weights, tn):
    # patches: (2, N_pad, Kp) bf16   weights: (2, Kp, 32) bf16
    n_paths, n_pad, kp = patches.shape
    n_tiles = n_pad // tn
    return pl.pallas_call(
        _conv_stats_kernel,
        out_shape=(jax.ShapeDtypeStruct((n_paths, n_pad, 32), jnp.float32),
                   jax.ShapeDtypeStruct((n_paths, n_tiles, 2, 32), jnp.float32)),
        grid=(n_paths, n_tiles),
        in_specs=[pl.BlockSpec((1, tn, kp), lambda p, i: (p, i, 0)),
                  pl.BlockSpec((1, kp, 32), lambda p, i: (p, 0, 0))],
        out_specs=(pl.BlockSpec((1, tn, 32), lambda p, i: (p, i, 0)),
                   pl.BlockSpec((1, 1, 2, 32), lambda p, i: (p, i, 0, 0))),
        compiler_params=pltpu.CompilerParams(
            dimension_semantics=("parallel", "parallel")),
    )(patches, weights)


def bn_relu_pool(z_win, scale, shift):
    # z_win: (B, S_pool, 8, 32) f32;  scale/shift: (1, 32) f32
    b, s_pool, _, c = z_win.shape
    return pl.pallas_call(
        _bn_relu_pool_kernel,
        out_shape=jax.ShapeDtypeStruct((b, s_pool, c), jnp.float32),
        grid=(b,),
        in_specs=[pl.BlockSpec((1, s_pool, 8, c), lambda i: (i, 0, 0, 0)),
                  pl.BlockSpec((1, c), lambda i: (0, 0)),
                  pl.BlockSpec((1, c), lambda i: (0, 0))],
        out_specs=pl.BlockSpec((1, s_pool, c), lambda i: (i, 0, 0)),
        compiler_params=pltpu.CompilerParams(dimension_semantics=("parallel",)),
    )(z_win, scale, shift)


def fc_layer(x, w, b):
    n, f = x.shape
    co = w.shape[1]
    cost = pl.CostEstimate(flops=2 * n * f * co, transcendentals=0,
                           bytes_accessed=4 * (n * f + f * co + n * co))
    vmem = pl.BlockSpec(memory_space=pltpu.MemorySpace.VMEM)
    return pl.pallas_call(
        _fc_kernel,
        out_shape=jax.ShapeDtypeStruct((n, co), jnp.float32),
        in_specs=[vmem, vmem, vmem],
        out_specs=vmem,
        cost_estimate=cost,
    )(x, w, b)


# --------------------------------- glue -------------------------------------

def _patch_rows(xp, stride, d_rng, h_rng, w_rng):
    # xp: (B, D+2, H+2, W+2, C) padded channels-last input.
    # *_rng = (first_output_index, output_step, count) in conv-output coords.
    # Returns (B, nd, nh, nw, C*27) im2col rows; K is channel-major with the
    # 27 taps fastest, matching weight.reshape(32, C*27).
    sd, sh, sw = stride
    (d0, dst, nd), (h0, hst, nh), (w0, wst, nw) = d_rng, h_rng, w_rng
    B = xp.shape[0]
    C = xp.shape[-1]
    taps = []
    for kd in range(3):
        for kh in range(3):
            for kw in range(3):
                a0, astp = sd * d0 + kd, sd * dst
                b0, bstp = sh * h0 + kh, sh * hst
                c0, cstp = sw * w0 + kw, sw * wst
                taps.append(xp[:,
                               a0:a0 + (nd - 1) * astp + 1:astp,
                               b0:b0 + (nh - 1) * bstp + 1:bstp,
                               c0:c0 + (nw - 1) * cstp + 1:cstp,
                               :])
    p = jnp.stack(taps, axis=-2)          # (B, nd, nh, nw, 27, C)
    p = jnp.swapaxes(p, -1, -2)           # (B, nd, nh, nw, C, 27)
    return p.reshape(B, nd, nh, nw, C * 27)


def _im2col_pool_ordered(x_ncdhw, stride):
    # Build im2col rows ordered as (b, dp, hp, wp, 2x2x2-window) for the
    # pooled region, followed by any conv-output voxels dropped by the
    # floor-mode MaxPool3d(2) (those still feed the BatchNorm statistics).
    sd, sh, sw = stride
    x = jnp.transpose(x_ncdhw, (0, 2, 3, 4, 1))     # (B, D, H, W, C)
    B, D, H, W, C = x.shape
    xp = jnp.pad(x, ((0, 0), (1, 1), (1, 1), (1, 1), (0, 0)))
    Do = (D - 1) // sd + 1
    Ho = (H - 1) // sh + 1
    Wo = (W - 1) // sw + 1
    D2, H2, W2 = Do // 2, Ho // 2, Wo // 2
    K = C * 27

    parts = []
    if D2 and H2 and W2:
        win = []
        for dd in range(2):
            for hh in range(2):
                for ww in range(2):
                    win.append(_patch_rows(xp, stride,
                                           (dd, 2, D2), (hh, 2, H2), (ww, 2, W2)))
        pw = jnp.stack(win, axis=4)                  # (B, D2, H2, W2, 8, K)
        parts.append(pw.reshape(B * D2 * H2 * W2 * 8, K))

    def _leftover(dr, hr, wr):
        if dr[2] > 0 and hr[2] > 0 and wr[2] > 0:
            r = _patch_rows(xp, stride, dr, hr, wr)
            parts.append(r.reshape(-1, K))

    _leftover((2 * D2, 1, Do - 2 * D2), (0, 1, Ho), (0, 1, Wo))
    _leftover((0, 1, 2 * D2), (2 * H2, 1, Ho - 2 * H2), (0, 1, Wo))
    _leftover((0, 1, 2 * D2), (0, 1, 2 * H2), (2 * W2, 1, Wo - 2 * W2))

    rows = parts[0] if len(parts) == 1 else jnp.concatenate(parts, axis=0)
    return rows, (Do, Ho, Wo, D2, H2, W2)


def forward(params, x):
    # x: (B, C, D, H, W) float32 (PyTorch NCDHW layout).
    B = x.shape[0]
    x_slow = x[:, :, ::16, :, :]
    x_fast = x[:, :, ::2, :, :]

    rows_s, dims_s = _im2col_pool_ordered(x_slow, (1, 2, 2))
    rows_f, dims_f = _im2col_pool_ordered(x_fast, (8, 2, 2))

    K = rows_s.shape[1]
    kp = _round_up(K, 128)
    n_s, n_f = rows_s.shape[0], rows_f.shape[0]
    n_max = max(n_s, n_f)
    tn = min(512, _round_up(n_max, 8))
    n_pad = _round_up(n_max, tn)

    def _prep_rows(r):
        r = jnp.pad(r, ((0, n_pad - r.shape[0]), (0, kp - K)))
        return r.astype(jnp.bfloat16)

    def _prep_w(w):
        wm = jnp.transpose(w.reshape(w.shape[0], -1))          # (K, 32)
        return jnp.pad(wm, ((0, kp - K), (0, 0))).astype(jnp.bfloat16)

    patches = jnp.stack([_prep_rows(rows_s), _prep_rows(rows_f)], axis=0)
    weights = jnp.stack([_prep_w(params["w_slow"]), _prep_w(params["w_fast"])],
                        axis=0)

    # Fused conv-matmul + partial BN stats for both paths in one call.
    z, stats = conv_matmul_stats(patches, weights, tn)

    path_cfg = [(dims_s, n_s, params["gamma_slow"], params["beta_slow"]),
                (dims_f, n_f, params["gamma_fast"], params["beta_fast"])]
    feats = []
    for p, (dims, n_true, gamma, beta) in enumerate(path_cfg):
        Do, Ho, Wo, D2, H2, W2 = dims
        # Fold global (training-mode) BatchNorm into a per-channel affine.
        tot = jnp.sum(stats[p], axis=0)                        # (2, 32)
        mean = tot[0] / n_true
        var = jnp.maximum(tot[1] / n_true - mean * mean, 0.0)  # biased var
        scale = gamma * jax.lax.rsqrt(var + EPS)
        shift = beta - mean * scale
        s_pool = D2 * H2 * W2
        z_win = z[p, :B * s_pool * 8].reshape(B, s_pool, 8, 32)
        pooled = bn_relu_pool(z_win, scale.reshape(1, 32), shift.reshape(1, 32))
        # (B, S_pool, 32) -> PyTorch channel-major flatten (tiny transpose).
        feats.append(jnp.transpose(pooled, (0, 2, 1)).reshape(B, 32 * s_pool))

    feat = jnp.concatenate(feats, axis=1)
    return fc_layer(feat, params["w_fc"], params["b_fc"].reshape(1, -1))


# ------------------------------ parameter init ------------------------------

def _path_feat_dim(D, H, W, sd):
    Do = (D - 1) // sd + 1
    Ho = (H - 1) // 2 + 1
    Wo = (W - 1) // 2 + 1
    return 32 * (Do // 2) * (Ho // 2) * (Wo // 2)


def init_params(key, in_channels, feat_dim):
    k1, k2, k3, k4, k5 = jax.random.split(key, 5)
    return {
        "w_slow": jax.random.normal(k1, (32, in_channels, 3, 3, 3), jnp.float32) * 0.1,
        # Conv biases cancel exactly under training-mode BatchNorm; kept for
        # parameter-interface parity but not applied in the kernels.
        "b_slow": jax.random.normal(k2, (32,), jnp.float32) * 0.01,
        "gamma_slow": jnp.ones((32,), jnp.float32),
        "beta_slow": jnp.zeros((32,), jnp.float32),
        "w_fast": jax.random.normal(k3, (32, in_channels, 3, 3, 3), jnp.float32) * 0.1,
        "b_fast": jax.random.normal(k4, (32,), jnp.float32) * 0.01,
        "gamma_fast": jnp.ones((32,), jnp.float32),
        "beta_fast": jnp.zeros((32,), jnp.float32),
        "w_fc": jax.random.normal(k5, (feat_dim, 64), jnp.float32) * 0.02,
        "b_fc": jnp.zeros((64,), jnp.float32),
    }


if __name__ == "__main__":
    # Small shapes consistent with the module: B=2, C=4, D=32, H=W=16.
    B, C, D, H, W = 2, 4, 32, 16, 16
    key = jax.random.PRNGKey(0)
    kx, kparams = jax.random.split(key)
    x = jax.random.normal(kx, (B, C, D, H, W), jnp.float32)

    # Mimic the constructor's shape probe to size the fc layer.
    D_slow = (D + 15) // 16
    D_fast = (D + 1) // 2
    feat_dim = _path_feat_dim(D_slow, H, W, 1) + _path_feat_dim(D_fast, H, W, 8)

    params = init_params(kparams, C, feat_dim)
    out = jax.jit(forward)(params, x)
    out = jax.block_until_ready(out)
    assert out.shape == (B, 64), out.shape
    print("KERNEL_OK")
</pallas_src>

<mosaic_0001>
module attributes {stable_mosaic.version = 11 : i64} {
  func.func @_conv_stats_kernel(%arg0: i32, %arg1: i32, %arg2: memref<1x256x128xbf16, #tpu.memory_space<vmem>>, %arg3: memref<1x128x32xbf16, #tpu.memory_space<vmem>>, %arg4: memref<1x256x32xf32, #tpu.memory_space<vmem>>, %arg5: memref<1x1x2x32xf32, #tpu.memory_space<vmem>>) attributes {dimension_semantics = [#tpu.dimension_semantics<parallel>, #tpu.dimension_semantics<parallel>], iteration_bounds = array<i64: 2, 1>, scalar_prefetch = 0 : i64, scratch_operands = 0 : i64, tpu.core_type = #tpu.core_type<tc>, window_params = [{transform_indices = @transform_0, window_bounds = array<i64: 1, 256, 128>}, {transform_indices = @transform_1, window_bounds = array<i64: 1, 128, 32>}, {transform_indices = @transform_2, window_bounds = array<i64: 1, 256, 32>}, {transform_indices = @transform_3, window_bounds = array<i64: 1, 1, 2, 32>}]} {
    %c0 = arith.constant 0 : index
    %c0_0 = arith.constant 0 : index
    %c0_1 = arith.constant 0 : index
    %0 = vector.load %arg2[%c0, %c0_0, %c0_1] : memref<1x256x128xbf16, #tpu.memory_space<vmem>>, vector<1x256x128xbf16>
    %1 = vector.shape_cast %0 : vector<1x256x128xbf16> to vector<256x128xbf16>
    %c0_2 = arith.constant 0 : index
    %c0_3 = arith.constant 0 : index
    %c0_4 = arith.constant 0 : index
    %2 = vector.load %arg3[%c0_2, %c0_3, %c0_4] : memref<1x128x32xbf16, #tpu.memory_space<vmem>>, vector<1x128x32xbf16>
    %3 = vector.shape_cast %2 : vector<1x128x32xbf16> to vector<128x32xbf16>
    %cst = arith.constant dense<0.000000e+00> : vector<256x32xf32>
    %4 = tpu.matmul %1, %3, %cst {dimension_numbers = #tpu.dot_dimension_numbers<[1], [0], [0], [1], [0, 0, 1, 1], [], []>} : vector<256x128xbf16>, vector<128x32xbf16>, vector<256x32xf32> -> vector<256x32xf32>
    %c0_5 = arith.constant 0 : index
    %c0_6 = arith.constant 0 : index
    %c0_7 = arith.constant 0 : index
    %5 = vector.load %arg4[%c0_5, %c0_6, %c0_7] : memref<1x256x32xf32, #tpu.memory_space<vmem>>, vector<1x256x32xf32>
    %6 = vector.shape_cast %5 : vector<1x256x32xf32> to vector<256x32xf32>
    %7 = vector.shape_cast %4 : vector<256x32xf32> to vector<1x256x32xf32>
    tpu.vector_store %arg4[%c0_5, %c0_6, %c0_7], %7 {strides = array<i32>} : memref<1x256x32xf32, #tpu.memory_space<vmem>>, vector<1x256x32xf32>,
    %cst_8 = arith.constant dense<0.000000e+00> : vector<32xf32>
    %8 = vector.multi_reduction <add>, %4, %cst_8 [0] : vector<256x32xf32> to vector<32xf32>
    %9 = vector.shape_cast %8 : vector<32xf32> to vector<1x32xf32>
    %c0_9 = arith.constant 0 : index
    %c0_10 = arith.constant 0 : index
    %c0_11 = arith.constant 0 : index
    %c0_12 = arith.constant 0 : index
    %10 = vector.load %arg5[%c0_9, %c0_10, %c0_11, %c0_12] : memref<1x1x2x32xf32, #tpu.memory_space<vmem>>, vector<1x1x1x32xf32>
    %11 = vector.shape_cast %10 : vector<1x1x1x32xf32> to vector<1x32xf32>
    %12 = vector.shape_cast %9 : vector<1x32xf32> to vector<1x1x1x32xf32>
    tpu.vector_store %arg5[%c0_9, %c0_10, %c0_11, %c0_12], %12 {strides = array<i32>} : memref<1x1x2x32xf32, #tpu.memory_space<vmem>>, vector<1x1x1x32xf32>,
    %13 = arith.mulf %4, %4 : vector<256x32xf32>
    %cst_13 = arith.constant dense<0.000000e+00> : vector<32xf32>
    %14 = vector.multi_reduction <add>, %13, %cst_13 [0] : vector<256x32xf32> to vector<32xf32>
    %15 = vector.shape_cast %14 : vector<32xf32> to vector<1x32xf32>
    %c0_14 = arith.constant 0 : index
    %c0_15 = arith.constant 0 : index
    %c1 = arith.constant 1 : index
    %c0_16 = arith.constant 0 : index
    %16 = vector.load %arg5[%c0_14, %c0_15, %c1, %c0_16] : memref<1x1x2x32xf32, #tpu.memory_space<vmem>>, vector<1x1x1x32xf32>
    %17 = vector.shape_cast %16 : vector<1x1x1x32xf32> to vector<1x32xf32>
    %18 = vector.shape_cast %15 : vector<1x32xf32> to vector<1x1x1x32xf32>
    tpu.vector_store %arg5[%c0_14, %c0_15, %c1, %c0_16], %18 {strides = array<i32>} : memref<1x1x2x32xf32, #tpu.memory_space<vmem>>, vector<1x1x1x32xf32>,
    return
  }
  func.func @transform_0(%arg0: i32, %arg1: i32) -> (i32, i32, i32) {
    %c0_i32 = arith.constant 0 : i32
    %c0_i32_0 = arith.constant 0 : i32
    return %arg0, %arg1, %c0_i32 : i32, i32, i32
  }
  func.func @transform_1(%arg0: i32, %arg1: i32) -> (i32, i32, i32) {
    %c0_i32 = arith.constant 0 : i32
    %c0_i32_0 = arith.constant 0 : i32
    %c0_i32_1 = arith.constant 0 : i32
    return %arg0, %c0_i32, %c0_i32_0 : i32, i32, i32
  }
  func.func @transform_2(%arg0: i32, %arg1: i32) -> (i32, i32, i32) {
    %c0_i32 = arith.constant 0 : i32
    %c0_i32_0 = arith.constant 0 : i32
    return %arg0, %arg1, %c0_i32 : i32, i32, i32
  }
  func.func @transform_3(%arg0: i32, %arg1: i32) -> (i32, i32, i32, i32) {
    %c0_i32 = arith.constant 0 : i32
    %c0_i32_0 = arith.constant 0 : i32
    %c0_i32_1 = arith.constant 0 : i32
    return %arg0, %arg1, %c0_i32, %c0_i32_0 : i32, i32, i32, i32
  }
}

module attributes {stable_mosaic.version = 11 : i64} {
  func.func @_bn_relu_pool_kernel(%arg0: i32, %arg1: memref<1x16x8x32xf32, #tpu.memory_space<vmem>>, %arg2: memref<1x32xf32, #tpu.memory_space<vmem>>, %arg3: memref<1x32xf32, #tpu.memory_space<vmem>>, %arg4: memref<1x16x32xf32, #tpu.memory_space<vmem>>) attributes {dimension_semantics = [#tpu.dimension_semantics<parallel>], iteration_bounds = array<i64: 2>, scalar_prefetch = 0 : i64, scratch_operands = 0 : i64, tpu.core_type = #tpu.core_type<tc>, window_params = [{transform_indices = @transform_0, window_bounds = array<i64: 1, 16, 8, 32>}, {pipeline_mode = #tpu.pipeline_mode<synchronous>, transform_indices = @transform_1, window_bounds = array<i64: 1, 32>}, {pipeline_mode = #tpu.pipeline_mode<synchronous>, transform_indices = @transform_2, window_bounds = array<i64: 1, 32>}, {transform_indices = @transform_3, window_bounds = array<i64: 1, 16, 32>}]} {
    %c0 = arith.constant 0 : index
    %c0_0 = arith.constant 0 : index
    %0 = vector.load %arg2[%c0, %c0_0] : memref<1x32xf32, #tpu.memory_space<vmem>>, vector<1x32xf32>
    %c0_1 = arith.constant 0 : index
    %c0_2 = arith.constant 0 : index
    %1 = vector.load %arg3[%c0_1, %c0_2] : memref<1x32xf32, #tpu.memory_space<vmem>>, vector<1x32xf32>
    %c0_3 = arith.constant 0 : index
    %c0_4 = arith.constant 0 : index
    %c0_5 = arith.constant 0 : index
    %c0_6 = arith.constant 0 : index
    %2 = vector.load %arg1[%c0_3, %c0_4, %c0_5, %c0_6] : memref<1x16x8x32xf32, #tpu.memory_space<vmem>>, vector<1x16x1x32xf32>
    %3 = vector.shape_cast %2 : vector<1x16x1x32xf32> to vector<16x32xf32>
    %4 = vector.broadcast %0 : vector<1x32xf32> to vector<16x32xf32>
    %5 = arith.mulf %3, %4 : vector<16x32xf32>
    %6 = vector.broadcast %1 : vector<1x32xf32> to vector<16x32xf32>
    %7 = arith.addf %5, %6 : vector<16x32xf32>
    %c0_7 = arith.constant 0 : index
    %c0_8 = arith.constant 0 : index
    %c1 = arith.constant 1 : index
    %c0_9 = arith.constant 0 : index
    %8 = vector.load %arg1[%c0_7, %c0_8, %c1, %c0_9] : memref<1x16x8x32xf32, #tpu.memory_space<vmem>>, vector<1x16x1x32xf32>
    %9 = vector.shape_cast %8 : vector<1x16x1x32xf32> to vector<16x32xf32>
    %10 = vector.broadcast %0 : vector<1x32xf32> to vector<16x32xf32>
    %11 = arith.mulf %9, %10 : vector<16x32xf32>
    %12 = vector.broadcast %1 : vector<1x32xf32> to vector<16x32xf32>
    %13 = arith.addf %11, %12 : vector<16x32xf32>
    %14 = arith.maximumf %7, %13 : vector<16x32xf32>
    %c0_10 = arith.constant 0 : index
    %c0_11 = arith.constant 0 : index
    %c2 = arith.constant 2 : index
    %c0_12 = arith.constant 0 : index
    %15 = vector.load %arg1[%c0_10, %c0_11, %c2, %c0_12] : memref<1x16x8x32xf32, #tpu.memory_space<vmem>>, vector<1x16x1x32xf32>
    %16 = vector.shape_cast %15 : vector<1x16x1x32xf32> to vector<16x32xf32>
    %17 = vector.broadcast %0 : vector<1x32xf32> to vector<16x32xf32>
    %18 = arith.mulf %16, %17 : vector<16x32xf32>
    %19 = vector.broadcast %1 : vector<1x32xf32> to vector<16x32xf32>
    %20 = arith.addf %18, %19 : vector<16x32xf32>
    %21 = arith.maximumf %14, %20 : vector<16x32xf32>
    %c0_13 = arith.constant 0 : index
    %c0_14 = arith.constant 0 : index
    %c3 = arith.constant 3 : index
    %c0_15 = arith.constant 0 : index
    %22 = vector.load %arg1[%c0_13, %c0_14, %c3, %c0_15] : memref<1x16x8x32xf32, #tpu.memory_space<vmem>>, vector<1x16x1x32xf32>
    %23 = vector.shape_cast %22 : vector<1x16x1x32xf32> to vector<16x32xf32>
    %24 = vector.broadcast %0 : vector<1x32xf32> to vector<16x32xf32>
    %25 = arith.mulf %23, %24 : vector<16x32xf32>
    %26 = vector.broadcast %1 : vector<1x32xf32> to vector<16x32xf32>
    %27 = arith.addf %25, %26 : vector<16x32xf32>
    %28 = arith.maximumf %21, %27 : vector<16x32xf32>
    %c0_16 = arith.constant 0 : index
    %c0_17 = arith.constant 0 : index
    %c4 = arith.constant 4 : index
    %c0_18 = arith.constant 0 : index
    %29 = vector.load %arg1[%c0_16, %c0_17, %c4, %c0_18] : memref<1x16x8x32xf32, #tpu.memory_space<vmem>>, vector<1x16x1x32xf32>
    %30 = vector.shape_cast %29 : vector<1x16x1x32xf32> to vector<16x32xf32>
    %31 = vector.broadcast %0 : vector<1x32xf32> to vector<16x32xf32>
    %32 = arith.mulf %30, %31 : vector<16x32xf32>
    %33 = vector.broadcast %1 : vector<1x32xf32> to vector<16x32xf32>
    %34 = arith.addf %32, %33 : vector<16x32xf32>
    %35 = arith.maximumf %28, %34 : vector<16x32xf32>
    %c0_19 = arith.constant 0 : index
    %c0_20 = arith.constant 0 : index
    %c5 = arith.constant 5 : index
    %c0_21 = arith.constant 0 : index
    %36 = vector.load %arg1[%c0_19, %c0_20, %c5, %c0_21] : memref<1x16x8x32xf32, #tpu.memory_space<vmem>>, vector<1x16x1x32xf32>
    %37 = vector.shape_cast %36 : vector<1x16x1x32xf32> to vector<16x32xf32>
    %38 = vector.broadcast %0 : vector<1x32xf32> to vector<16x32xf32>
    %39 = arith.mulf %37, %38 : vector<16x32xf32>
    %40 = vector.broadcast %1 : vector<1x32xf32> to vector<16x32xf32>
    %41 = arith.addf %39, %40 : vector<16x32xf32>
    %42 = arith.maximumf %35, %41 : vector<16x32xf32>
    %c0_22 = arith.constant 0 : index
    %c0_23 = arith.constant 0 : index
    %c6 = arith.constant 6 : index
    %c0_24 = arith.constant 0 : index
    %43 = vector.load %arg1[%c0_22, %c0_23, %c6, %c0_24] : memref<1x16x8x32xf32, #tpu.memory_space<vmem>>, vector<1x16x1x32xf32>
    %44 = vector.shape_cast %43 : vector<1x16x1x32xf32> to vector<16x32xf32>
    %45 = vector.broadcast %0 : vector<1x32xf32> to vector<16x32xf32>
    %46 = arith.mulf %44, %45 : vector<16x32xf32>
    %47 = vector.broadcast %1 : vector<1x32xf32> to vector<16x32xf32>
    %48 = arith.addf %46, %47 : vector<16x32xf32>
    %49 = arith.maximumf %42, %48 : vector<16x32xf32>
    %c0_25 = arith.constant 0 : index
    %c0_26 = arith.constant 0 : index
    %c7 = arith.constant 7 : index
    %c0_27 = arith.constant 0 : index
    %50 = vector.load %arg1[%c0_25, %c0_26, %c7, %c0_27] : memref<1x16x8x32xf32, #tpu.memory_space<vmem>>, vector<1x16x1x32xf32>
    %51 = vector.shape_cast %50 : vector<1x16x1x32xf32> to vector<16x32xf32>
    %52 = vector.broadcast %0 : vector<1x32xf32> to vector<16x32xf32>
    %53 = arith.mulf %51, %52 : vector<16x32xf32>
    %54 = vector.broadcast %1 : vector<1x32xf32> to vector<16x32xf32>
    %55 = arith.addf %53, %54 : vector<16x32xf32>
    %56 = arith.maximumf %49, %55 : vector<16x32xf32>
    %cst = arith.constant 0.000000e+00 : f32
    %57 = vector.broadcast %cst : f32 to vector<16x32xf32>
    %58 = arith.maximumf %56, %57 : vector<16x32xf32>
    %c0_28 = arith.constant 0 : index
    %c0_29 = arith.constant 0 : index
    %c0_30 = arith.constant 0 : index
    %59 = vector.load %arg4[%c0_28, %c0_29, %c0_30] : memref<1x16x32xf32, #tpu.memory_space<vmem>>, vector<1x16x32xf32>
    %60 = vector.shape_cast %59 : vector<1x16x32xf32> to vector<16x32xf32>
    %61 = vector.shape_cast %58 : vector<16x32xf32> to vector<1x16x32xf32>
    tpu.vector_store %arg4[%c0_28, %c0_29, %c0_30], %61 {strides = array<i32>} : memref<1x16x32xf32, #tpu.memory_space<vmem>>, vector<1x16x32xf32>,
    return
  }
  func.func @transform_0(%arg0: i32) -> (i32, i32, i32, i32) {
    %c0_i32 = arith.constant 0 : i32
    %c0_i32_0 = arith.constant 0 : i32
    %c0_i32_1 = arith.constant 0 : i32
    %c0_i32_2 = arith.constant 0 : i32
    return %arg0, %c0_i32, %c0_i32_0, %c0_i32_1 : i32, i32, i32, i32
  }
  func.func @transform_1(%arg0: i32) -> (i32, i32) {
    %c0_i32 = arith.constant 0 : i32
    %c0_i32_0 = arith.constant 0 : i32
    %c0_i32_1 = arith.constant 0 : i32
    return %c0_i32, %c0_i32_0 : i32, i32
  }
  func.func @transform_2(%arg0: i32) -> (i32, i32) {
    %c0_i32 = arith.constant 0 : i32
    %c0_i32_0 = arith.constant 0 : i32
    %c0_i32_1 = arith.constant 0 : i32
    return %c0_i32, %c0_i32_0 : i32, i32
  }
  func.func @transform_3(%arg0: i32) -> (i32, i32, i32) {
    %c0_i32 = arith.constant 0 : i32
    %c0_i32_0 = arith.constant 0 : i32
    %c0_i32_1 = arith.constant 0 : i32
    return %arg0, %c0_i32, %c0_i32_0 : i32, i32, i32
  }
}

module attributes {stable_mosaic.version = 11 : i64} {
  func.func @_fc_kernel(%arg0: memref<2x1024xf32, #tpu.memory_space<vmem>>, %arg1: memref<1024x64xf32, #tpu.memory_space<vmem>>, %arg2: memref<1x64xf32, #tpu.memory_space<vmem>>, %arg3: memref<2x64xf32, #tpu.memory_space<vmem>>) attributes {dimension_semantics = [], scalar_prefetch = 0 : i64, scratch_operands = 0 : i64, tpu.core_type = #tpu.core_type<tc>} {
    %c0 = arith.constant 0 : index
    %c0_0 = arith.constant 0 : index
    %0 = vector.load %arg0[%c0, %c0_0] : memref<2x1024xf32, #tpu.memory_space<vmem>>, vector<2x1024xf32>
    %c0_1 = arith.constant 0 : index
    %c0_2 = arith.constant 0 : index
    %1 = vector.load %arg1[%c0_1, %c0_2] : memref<1024x64xf32, #tpu.memory_space<vmem>>, vector<1024x64xf32>
    %cst = arith.constant dense<0.000000e+00> : vector<2x64xf32>
    %2 = tpu.matmul %0, %1, %cst {dimension_numbers = #tpu.dot_dimension_numbers<[1], [0], [0], [1], [0, 0, 1, 1], [], []>} : vector<2x1024xf32>, vector<1024x64xf32>, vector<2x64xf32> -> vector<2x64xf32>
    %c0_3 = arith.constant 0 : index
    %c0_4 = arith.constant 0 : index
    %3 = vector.load %arg2[%c0_3, %c0_4] : memref<1x64xf32, #tpu.memory_space<vmem>>, vector<1x64xf32>
    %4 = vector.broadcast %3 : vector<1x64xf32> to vector<2x64xf32>
    %5 = arith.addf %2, %4 : vector<2x64xf32>
    %c0_5 = arith.constant 0 : index
    %c0_6 = arith.constant 0 : index
    %6 = vector.load %arg3[%c0_5, %c0_6] : memref<2x64xf32, #tpu.memory_space<vmem>>, vector<2x64xf32>
    tpu.vector_store %arg3[%c0_5, %c0_6], %5 {strides = array<i32>} : memref<2x64xf32, #tpu.memory_space<vmem>>, vector<2x64xf32>,
    return
  }
}

</mosaic_0001>

<llo_original>
// kernel: forward.4
$region0: #{forward.4}
  #allocation0 [shape = 'u32[]', space=smem, size = 0x4, offset = 0x4, fixed_abs, tag = 'smem constant byte address 0x4 - core index']
  #allocation1 [shape = 'u32[72,128]{1,0:T(1,128)}', space=vmem, size = 0x9000, scoped, tag = 'internal scratch']
  %s0 = inlined_call_operand.vmem [shape: bf16[2,256,128], index: 0, kind: input, shape index: {}]
  %s1 = inlined_call_operand.vmem [shape: bf16[2,128,32], index: 1, kind: input, shape index: {}]
  %s2 = inlined_call_operand.vmem [shape: f32[2,256,32], index: 2, kind: output, shape index: {0}]
  %s3 = inlined_call_operand.vmem [shape: f32[2,1,2,32], index: 3, kind: output, shape index: {1}]
  %4 = xla_tuple %s2, %s3
  %s5 = sld [smem:[#allocation0]]
  $region49: #{forward.4} parent=0
    _
  %s7 = ssub.s32 1, %s5
  %s8 = scalar_select 0, %s7, %s5
  loop: start=0, step=1, limit=4
  $region2: #{forward.4} parent=0 // loop_pre_header
    _
  $region3: #{forward.4} parent=0 // loop_header
    %s10 = sphi 0, %s14
    %p11 = scmp.ge.s32.totalorder %s10, 4
    %s17 = sphi 0, %s29
    %s18 = sphi 0, %s25
    %s19 = sphi 0, %s17
    %s20 = sphi 0, %s18
    %s21 = sphi 0, %s19
    %s22 = sphi 0, %s20
    %s34 = sphi 0, %s36
    %s37 = sphi 0, %s34
    %s38 = sphi 0, %s37
    %s54 = sphi 0, %s38
    %s60 = sphi 0, %s62
    %s63 = sphi 0, %s60
    %s64 = sphi 0, %s63
    %s80 = sphi 0, %s64
    %s88 = sphi 0, %s90
    %s91 = sphi 0, %s88
    %s92 = sphi 0, %s91
    %s108 = sphi 0, %s92
    %s116 = sphi 0, %s118
    %s119 = sphi 0, %s116
    %s120 = sphi 0, %s119
    %s136 = sphi 0, %s120
  $region4: #{forward.4} parent=0 // loop_header_branch
    %13 = sbr.rel (%p11) target = $region8
  $region5: #{forward.4} parent=0 // loop_body
    %s15 = ssub.s32 %s10, 1
    %s16 = ssub.s32 %s10, 2
    %s23 = sadd.s32 1, %s18
    %p24 = scmp.ge.s32.totalorder %s23, 1
    %s25 = scalar_select %p24, 0, %s23
    %s26 = sadd.s32 1, %s17
    %s27 = scalar_select %p24, %s26, %s17
    %p28 = scmp.ge.s32.totalorder %s27, 2
    %s29 = scalar_select %p28, 0, %s27
    %s30 = ssub.s32 %s17, %s29
    %s31 = ssub.s32 %s18, %s25
    %s32 = sor.u32 %s30, %s31
    %p33 = scmp.eq.s32.totalorder %s32, 0
    %s35 = sadd.s32 %s34, 1
    %s36 = scalar_select %p33, %s34, %s35
    %p39 = pneg %p33
    %p40 = scmp.eq.s32.totalorder %s10, 1
    %p41 = por %p39, %p40
    %p42 = scmp.ne.s32.totalorder %s34, %s37
    %p43 = scmp.eq.s32.totalorder %s10, 0
    %p44 = por %p42, %p43
    %p45 = scmp.ne.s32.totalorder %s34, %s37
    %p46 = scmp.eq.s32.totalorder %s15, 1
    %p47 = por %p45, %p46
    %p48 = scmp.ne.s32.totalorder %s37, %s38
    %p49 = scmp.eq.s32.totalorder %s15, 0
    %p50 = por %p48, %p49
    %p51 = scmp.ne.s32.totalorder %s37, %s38
    %p52 = scmp.eq.s32.totalorder %s16, 1
    %p53 = por %p51, %p52
    %p55 = scmp.ne.s32.totalorder %s38, %s54
    %p56 = scmp.eq.s32.totalorder %s16, 0
    %p57 = por %p55, %p56
    %s58 = ssub.s32 %s17, %s29
    %p59 = scmp.eq.s32.totalorder %s58, 0
    %s61 = sadd.s32 %s60, 1
    %s62 = scalar_select %p59, %s60, %s61
    %p65 = pneg %p59
    %p66 = scmp.eq.s32.totalorder %s10, 1
    %p67 = por %p65, %p66
    %p68 = scmp.ne.s32.totalorder %s60, %s63
    %p69 = scmp.eq.s32.totalorder %s10, 0
    %p70 = por %p68, %p69
    %p71 = scmp.ne.s32.totalorder %s60, %s63
    %p72 = scmp.eq.s32.totalorder %s15, 1
    %p73 = por %p71, %p72
    %p74 = scmp.ne.s32.totalorder %s63, %s64
    %p75 = scmp.eq.s32.totalorder %s15, 0
    %p76 = por %p74, %p75
    %p77 = scmp.ne.s32.totalorder %s63, %s64
    %p78 = scmp.eq.s32.totalorder %s16, 1
    %p79 = por %p77, %p78
    %p81 = scmp.ne.s32.totalorder %s64, %s80
    %p82 = scmp.eq.s32.totalorder %s16, 0
    %p83 = por %p81, %p82
    %s84 = ssub.s32 %s17, %s29
    %s85 = ssub.s32 %s18, %s25
    %s86 = sor.u32 %s84, %s85
    %p87 = scmp.eq.s32.totalorder %s86, 0
    %s89 = sadd.s32 %s88, 1
    %s90 = scalar_select %p87, %s88, %s89
    %p93 = pneg %p87
    %p94 = scmp.eq.s32.totalorder %s10, 1
    %p95 = por %p93, %p94
    %p96 = scmp.ne.s32.totalorder %s88, %s91
    %p97 = scmp.eq.s32.totalorder %s10, 0
    %p98 = por %p96, %p97
    %p99 = scmp.ne.s32.totalorder %s88, %s91
    %p100 = scmp.eq.s32.totalorder %s15, 1
    %p101 = por %p99, %p100
    %p102 = scmp.ne.s32.totalorder %s91, %s92
    %p103 = scmp.eq.s32.totalorder %s15, 0
    %p104 = por %p102, %p103
    %p105 = scmp.ne.s32.totalorder %s91, %s92
    %p106 = scmp.eq.s32.totalorder %s16, 1
    %p107 = por %p105, %p106
    %p109 = scmp.ne.s32.totalorder %s92, %s108
    %p110 = scmp.eq.s32.totalorder %s16, 0
    %p111 = por %p109, %p110
    %s112 = ssub.s32 %s17, %s29
    %s113 = ssub.s32 %s18, %s25
    %s114 = sor.u32 %s112, %s113
    %p115 = scmp.eq.s32.totalorder %s114, 0
    %s117 = sadd.s32 %s116, 1
    %s118 = scalar_select %p115, %s116, %s117
    %p121 = pneg %p115
    %p122 = scmp.eq.s32.totalorder %s10, 1
    %p123 = por %p121, %p122
    %p124 = scmp.ne.s32.totalorder %s116, %s119
    %p125 = scmp.eq.s32.totalorder %s10, 0
    %p126 = por %p124, %p125
    %p127 = scmp.ne.s32.totalorder %s116, %s119
    %p128 = scmp.eq.s32.totalorder %s15, 1
    %p129 = por %p127, %p128
    %p130 = scmp.ne.s32.totalorder %s119, %s120
    %p131 = scmp.eq.s32.totalorder %s15, 0
    %p132 = por %p130, %p131
    %p133 = scmp.ne.s32.totalorder %s119, %s120
    %p134 = scmp.eq.s32.totalorder %s16, 1
    %p135 = por %p133, %p134
    %p137 = scmp.ne.s32.totalorder %s120, %s136
    %p138 = scmp.eq.s32.totalorder %s16, 0
    %p139 = por %p137, %p138
    %p140 = scmp.le.s32.totalorder 1, %s10
    %p141 = scmp.lt.s32.totalorder %s10, 3
    %p142 = pnand %p140, %p141
    %p143 = pneg %p142
    // Predicated region
    $region9: #{forward.4} parent=5 // pred_check
      _
    $region10: #{forward.4} parent=5 // pred_check_branch
      %145 = sbr.rel (%p142) target = $region12
    $region11: #{forward.4} parent=5 // pred_region
      %s146 = ssub.s32 %s10, 1
    $region12: #{forward.4} parent=5 // pred_fallthru
      _
    %p147 = scmp.lt.s32.totalorder %s10, 2
    // Predicated region
    $region13: #{forward.4} parent=5 // pred_check
      %p148 = pneg %p147
    $region14: #{forward.4} parent=5 // pred_check_branch
      %150 = sbr.rel (%p148) target = $region16
    $region15: #{forward.4} parent=5 // pred_region
      // Predicated region
      $region17: #{forward.4} parent=15 // pred_check
        %p151 = pneg %p44
      $region18: #{forward.4} parent=15 // pred_check_branch
        %153 = sbr.rel (%p151) target = $region20
      $region19: #{forward.4} parent=15 // pred_region
        %s154 = smul.u32 32, %s18
        %p155 = scmp.lt.s32.totalorder %s17, 1
        %s156 = scalar_select %p155, %s17, 1
        %p157 = scmp.lt.s32.totalorder %s154, 31
        %s158 = scalar_select %p157, %s154, 31
        %s159 = smul.addr %s156, 32
        %s160 = sadd.s32 %s158, %s159
        %s161 = smul.addr %s160, 4
        %s162 = scalar_lea.vmem %s0, %s161
        %s163 = smul.u32 32, %s18
      $region20: #{forward.4} parent=15 // pred_fallthru
        _
      // Predicated region
      $region21: #{forward.4} parent=15 // pred_check
        %p164 = pneg %p70
      $region22: #{forward.4} parent=15 // pred_check_branch
        %166 = sbr.rel (%p164) target = $region24
      $region23: #{forward.4} parent=15 // pred_region
        %p167 = scmp.lt.s32.totalorder %s17, 1
        %s168 = scalar_select %p167, %s17, 1
        %s169 = smul.addr %s168, 16
        %s170 = smul.addr %s169, 4
        %s171 = scalar_lea.vmem %s1, %s170
      $region24: #{forward.4} parent=15 // pred_fallthru
        _
    $region16: #{forward.4} parent=5 // pred_fallthru
      _
    %p172 = scmp.le.s32.totalorder 1, %s10
    %p173 = scmp.lt.s32.totalorder %s10, 3
    %p174 = pnand %p172, %p173
    %p175 = pneg %p174
    // Predicated region
    $region25: #{forward.4} parent=5 // pred_check
      _
    $region26: #{forward.4} parent=5 // pred_check_branch
      %177 = sbr.rel (%p174) target = $region28
    $region27: #{forward.4} parent=5 // pred_region
      %s178 = ssub.s32 %s10, 1
      %s179 = smul.u32 32, %s20
      %p180 = scmp.lt.s32.totalorder %s19, 1
      %s181 = scalar_select %p180, %s19, 1
      %p182 = scmp.lt.s32.totalorder %s179, 31
      %s183 = scalar_select %p182, %s179, 31
      %s184 = smul.addr %s181, 32
      %s185 = sadd.s32 %s183, %s184
      %s186 = smul.addr %s185, 4
      %s187 = scalar_lea.vmem %s0, %s186
      %p188 = pneg %p50
      %p189 = pneg %p47
      %p190 = scmp.lt.s32.totalorder %s19, 1
      %s191 = scalar_select %p190, %s19, 1
      %s192 = smul.addr %s191, 16
      %s193 = smul.addr %s192, 4
      %s194 = scalar_lea.vmem %s1, %s193
      %p195 = pneg %p76
      %p196 = pneg %p73
      %p197 = pneg %p104
      %p198 = pneg %p101
      %s199 = smul.u32 32, %s20
      %p200 = scmp.lt.s32.totalorder %s19, 1
      %s201 = scalar_select %p200, %s19, 1
      %p202 = scmp.lt.s32.totalorder %s199, 31
      %s203 = scalar_select %p202, %s199, 31
      %s204 = smul.addr %s201, 32
      %s205 = sadd.s32 %s203, %s204
      %s206 = smul.addr %s205, 8
      %s207 = scalar_lea.vmem %s2, %s206
      %p208 = pneg %p132
      %p209 = pneg %p129
      %p210 = scmp.lt.s32.totalorder %s19, 1
      %s211 = scalar_select %p210, %s19, 1
      %p212 = scmp.lt.s32.totalorder %s20, 0
      %s213 = scalar_select %p212, %s20, 0
      %s214 = sadd.s32 %s213, %s211
      %s215 = smul.addr %s214, 2
      %s216 = scalar_lea.vmem %s3, %s215
      %s217 = smul.u32 32, %s20
      %p218 = scmp.lt.s32.totalorder %s19, 1
      %s219 = scalar_select %p218, %s19, 1
      %p220 = scmp.lt.s32.totalorder %s217, 31
      %s221 = scalar_select %p220, %s217, 31
      %s222 = smul.addr %s219, 32
      %s223 = sadd.s32 %s221, %s222
      %s224 = smul.addr %s223, 4
      %s225 = scalar_lea.vmem %s0, %s224
      %s226 = smul.u32 32, %s20
      %p227 = scmp.lt.s32.totalorder %s19, 1
      %s228 = scalar_select %p227, %s19, 1
      %s229 = smul.addr %s228, 16
      %s230 = smul.addr %s229, 4
      %s231 = scalar_lea.vmem %s1, %s230
      %s232 = smul.u32 32, %s20
      %p233 = scmp.lt.s32.totalorder %s19, 1
      %s234 = scalar_select %p233, %s19, 1
      %p235 = scmp.lt.s32.totalorder %s232, 31
      %s236 = scalar_select %p235, %s232, 31
      %s237 = smul.addr %s234, 32
      %s238 = sadd.s32 %s236, %s237
      %s239 = smul.addr %s238, 8
      %s240 = scalar_lea.vmem %s2, %s239
      %s241 = smul.u32 32, %s20
      %p242 = scmp.lt.s32.totalorder %s19, 1
      %s243 = scalar_select %p242, %s19, 1
      %p244 = scmp.lt.s32.totalorder %s20, 0
      %s245 = scalar_select %p244, %s20, 0
      %s246 = sadd.s32 %s245, %s243
      %s247 = smul.addr %s246, 2
      %s248 = scalar_lea.vmem %s3, %s247
      %v249 = vld [vmem:[%s225] sm:$0xf]
      %v250 = vld [vmem:[%s225 + $0x4] sm:$0xf]
      %v251 = vld [vmem:[%s225 + $0x8] sm:$0xf]
      %v252 = vld [vmem:[%s225 + $0xc] sm:$0xf]
      %v253 = vld [vmem:[%s225 + $0x10] sm:$0xf]
      %v254 = vld [vmem:[%s225 + $0x14] sm:$0xf]
      %v255 = vld [vmem:[%s225 + $0x18] sm:$0xf]
      %v256 = vld [vmem:[%s225 + $0x1c] sm:$0xf]
      %v257 = vld [vmem:[%s225 + $0x20] sm:$0xf]
      %v258 = vld [vmem:[%s225 + $0x24] sm:$0xf]
      %v259 = vld [vmem:[%s225 + $0x28] sm:$0xf]
      %v260 = vld [vmem:[%s225 + $0x2c] sm:$0xf]
      %v261 = vld [vmem:[%s225 + $0x30] sm:$0xf]
      %v262 = vld [vmem:[%s225 + $0x34] sm:$0xf]
      %v263 = vld [vmem:[%s225 + $0x38] sm:$0xf]
      %v264 = vld [vmem:[%s225 + $0x3c] sm:$0xf]
      %v265 = vld [vmem:[%s225 + $0x40] sm:$0xf]
      %v266 = vld [vmem:[%s225 + $0x44] sm:$0xf]
      %v267 = vld [vmem:[%s225 + $0x48] sm:$0xf]
      %v268 = vld [vmem:[%s225 + $0x4c] sm:$0xf]
      %v269 = vld [vmem:[%s225 + $0x50] sm:$0xf]
      %v270 = vld [vmem:[%s225 + $0x54] sm:$0xf]
      %v271 = vld [vmem:[%s225 + $0x58] sm:$0xf]
      %v272 = vld [vmem:[%s225 + $0x5c] sm:$0xf]
      %v273 = vld [vmem:[%s225 + $0x60] sm:$0xf]
      %v274 = vld [vmem:[%s225 + $0x64] sm:$0xf]
      %v275 = vld [vmem:[%s225 + $0x68] sm:$0xf]
      %v276 = vld [vmem:[%s225 + $0x6c] sm:$0xf]
      %v277 = vld [vmem:[%s225 + $0x70] sm:$0xf]
      %v278 = vld [vmem:[%s225 + $0x74] sm:$0xf]
      %v279 = vld [vmem:[%s225 + $0x78] sm:$0xf]
      %v280 = vld [vmem:[%s225 + $0x7c] sm:$0xf]
      %v281 = vld [vmem:[%s231] sm:$0xf]
      %v282 = vld [vmem:[%s231 + $0x4] sm:$0xf]
      %v283 = vld [vmem:[%s231 + $0x8] sm:$0xf]
      %v284 = vld [vmem:[%s231 + $0xc] sm:$0xf]
      %v285 = vld [vmem:[%s231 + $0x10] sm:$0xf]
      %v286 = vld [vmem:[%s231 + $0x14] sm:$0xf]
      %v287 = vld [vmem:[%s231 + $0x18] sm:$0xf]
      %v288 = vld [vmem:[%s231 + $0x1c] sm:$0xf]
      %v289 = vld [vmem:[%s231 + $0x20] sm:$0xf]
      %v290 = vld [vmem:[%s231 + $0x24] sm:$0xf]
      %v291 = vld [vmem:[%s231 + $0x28] sm:$0xf]
      %v292 = vld [vmem:[%s231 + $0x2c] sm:$0xf]
      %v293 = vld [vmem:[%s231 + $0x30] sm:$0xf]
      %v294 = vld [vmem:[%s231 + $0x34] sm:$0xf]
      %v295 = vld [vmem:[%s231 + $0x38] sm:$0xf]
      %v296 = vld [vmem:[%s231 + $0x3c] sm:$0xf]
      %v329 = vunpack.c.l.b16 %v249
      %v330 = vunpack.c.l.b16 %v250
      %v331 = vunpack.c.l.b16 %v251
      %v332 = vunpack.c.l.b16 %v252
      %v333 = vunpack.c.l.b16 %v253
      %v334 = vunpack.c.l.b16 %v254
      %v335 = vunpack.c.l.b16 %v255
      %v336 = vunpack.c.l.b16 %v256
      %v337 = vunpack.c.l.b16 %v257
      %v338 = vunpack.c.l.b16 %v258
      %v339 = vunpack.c.l.b16 %v259
      %v340 = vunpack.c.l.b16 %v260
      %v341 = vunpack.c.l.b16 %v261
      %v342 = vunpack.c.l.b16 %v262
      %v343 = vunpack.c.l.b16 %v263
      %v344 = vunpack.c.l.b16 %v264
      %v345 = vunpack.c.l.b16 %v265
      %v346 = vunpack.c.l.b16 %v266
      %v347 = vunpack.c.l.b16 %v267
      %v348 = vunpack.c.l.b16 %v268
      %v349 = vunpack.c.l.b16 %v269
      %v350 = vunpack.c.l.b16 %v270
      %v351 = vunpack.c.l.b16 %v271
      %v352 = vunpack.c.l.b16 %v272
      %v353 = vunpack.c.l.b16 %v273
      %v354 = vunpack.c.l.b16 %v274
      %v355 = vunpack.c.l.b16 %v275
      %v356 = vunpack.c.l.b16 %v276
      %v357 = vunpack.c.l.b16 %v277
      %v358 = vunpack.c.l.b16 %v278
      %v359 = vunpack.c.l.b16 %v279
      %v360 = vunpack.c.l.b16 %v280
      %v361 = vpack.c.b16 %v330, %v329
      %v362 = vpack.c.b16 %v332, %v331
      %v363 = vpack.c.b16 %v334, %v333
      %v364 = vpack.c.b16 %v336, %v335
      %v365 = vpack.c.b16 %v338, %v337
      %v366 = vpack.c.b16 %v340, %v339
      %v367 = vpack.c.b16 %v342, %v341
      %v368 = vpack.c.b16 %v344, %v343
      %v369 = vpack.c.b16 %v346, %v345
      %v370 = vpack.c.b16 %v348, %v347
      %v371 = vpack.c.b16 %v350, %v349
      %v372 = vpack.c.b16 %v352, %v351
      %v373 = vpack.c.b16 %v354, %v353
      %v374 = vpack.c.b16 %v356, %v355
      %v375 = vpack.c.b16 %v358, %v357
      %v376 = vpack.c.b16 %v360, %v359
      %v409 = vunpack.c.l.b16 %v281
      %v410 = vunpack.c.l.b16 %v282
      %v411 = vunpack.c.l.b16 %v283
      %v412 = vunpack.c.l.b16 %v284
      %v413 = vunpack.c.l.b16 %v285
      %v414 = vunpack.c.l.b16 %v286
      %v415 = vunpack.c.l.b16 %v287
      %v416 = vunpack.c.l.b16 %v288
      %v417 = vunpack.c.l.b16 %v289
      %v418 = vunpack.c.l.b16 %v290
      %v419 = vunpack.c.l.b16 %v291
      %v420 = vunpack.c.l.b16 %v292
      %v421 = vunpack.c.l.b16 %v293
      %v422 = vunpack.c.l.b16 %v294
      %v423 = vunpack.c.l.b16 %v295
      %v424 = vunpack.c.l.b16 %v296
      %v425 = vpack.c.b16 %v410, %v409
      %v426 = vpack.c.b16 %v412, %v411
      %v427 = vpack.c.b16 %v414, %v413
      %v428 = vpack.c.b16 %v416, %v415
      %v429 = vpack.c.b16 %v418, %v417
      %v430 = vpack.c.b16 %v420, %v419
      %v431 = vpack.c.b16 %v422, %v421
      %v432 = vpack.c.b16 %v424, %v423
      %441 = vmatpush.bf16.msra.mxu0 %v432
      %442 = vmatpush.bf16.msra.mxu0 %v431
      %443 = vmatpush.bf16.msra.mxu0 %v430
      %444 = vmatpush.bf16.msra.mxu0 %v429
      %445 = vmatpush.bf16.msra.mxu0 %v428
      %446 = vmatpush.bf16.msra.mxu0 %v427
      %447 = vmatpush.bf16.msra.mxu0 %v426
      %448 = vmatpush.bf16.msra.mxu0 %v425
      %449 = vmatmul.bf16.gmra.mxu0 %v361
      %v450 = vpop.f32.mrf.mxu0
      %v451 = vadd.f32 0.0, %v450
      %v452 = vpop.f32.mrf.mxu0
      %v453 = vadd.f32 0.0, %v452
      %454 = vmatmul.bf16.gmra.mxu0 %v362
      %v455 = vpop.f32.mrf.mxu0
      %v456 = vadd.f32 0.0, %v455
      %v457 = vpop.f32.mrf.mxu0
      %v458 = vadd.f32 0.0, %v457
      %459 = vmatmul.bf16.gmra.mxu0 %v363
      %v460 = vpop.f32.mrf.mxu0
      %v461 = vadd.f32 0.0, %v460
      %v462 = vpop.f32.mrf.mxu0
      %v463 = vadd.f32 0.0, %v462
      %464 = vmatmul.bf16.gmra.mxu0 %v364
      %v465 = vpop.f32.mrf.mxu0
      %v466 = vadd.f32 0.0, %v465
      %v467 = vpop.f32.mrf.mxu0
      %v468 = vadd.f32 0.0, %v467
      %469 = vmatmul.bf16.gmra.mxu0 %v365
      %v470 = vpop.f32.mrf.mxu0
      %v471 = vadd.f32 0.0, %v470
      %v472 = vpop.f32.mrf.mxu0
      %v473 = vadd.f32 0.0, %v472
      %474 = vmatmul.bf16.gmra.mxu0 %v366
      %v475 = vpop.f32.mrf.mxu0
      %v476 = vadd.f32 0.0, %v475
      %v477 = vpop.f32.mrf.mxu0
      %v478 = vadd.f32 0.0, %v477
      %479 = vmatmul.bf16.gmra.mxu0 %v367
      %v480 = vpop.f32.mrf.mxu0
      %v481 = vadd.f32 0.0, %v480
      %v482 = vpop.f32.mrf.mxu0
      %v483 = vadd.f32 0.0, %v482
      %484 = vmatmul.bf16.gmra.mxu0 %v368
      %v485 = vpop.f32.mrf.mxu0
      %v486 = vadd.f32 0.0, %v485
      %v487 = vpop.f32.mrf.mxu0
      %v488 = vadd.f32 0.0, %v487
      %489 = vmatmul.bf16.gmra.mxu0 %v369
      %v490 = vpop.f32.mrf.mxu0
      %v491 = vadd.f32 0.0, %v490
      %v492 = vpop.f32.mrf.mxu0
      %v493 = vadd.f32 0.0, %v492
      %494 = vmatmul.bf16.gmra.mxu0 %v370
      %v495 = vpop.f32.mrf.mxu0
      %v496 = vadd.f32 0.0, %v495
      %v497 = vpop.f32.mrf.mxu0
      %v498 = vadd.f32 0.0, %v497
      %499 = vmatmul.bf16.gmra.mxu0 %v371
      %v500 = vpop.f32.mrf.mxu0
      %v501 = vadd.f32 0.0, %v500
      %v502 = vpop.f32.mrf.mxu0
      %v503 = vadd.f32 0.0, %v502
      %504 = vmatmul.bf16.gmra.mxu0 %v372
      %v505 = vpop.f32.mrf.mxu0
      %v506 = vadd.f32 0.0, %v505
      %v507 = vpop.f32.mrf.mxu0
      %v508 = vadd.f32 0.0, %v507
      %509 = vmatmul.bf16.gmra.mxu0 %v373
      %v510 = vpop.f32.mrf.mxu0
      %v511 = vadd.f32 0.0, %v510
      %v512 = vpop.f32.mrf.mxu0
      %v513 = vadd.f32 0.0, %v512
      %514 = vmatmul.bf16.gmra.mxu0 %v374
      %v515 = vpop.f32.mrf.mxu0
      %v516 = vadd.f32 0.0, %v515
      %v517 = vpop.f32.mrf.mxu0
      %v518 = vadd.f32 0.0, %v517
      %519 = vmatmul.bf16.gmra.mxu0 %v375
      %v520 = vpop.f32.mrf.mxu0
      %v521 = vadd.f32 0.0, %v520
      %v522 = vpop.f32.mrf.mxu0
      %v523 = vadd.f32 0.0, %v522
      %524 = vmatmul.bf16.gmra.mxu0 %v376
      %v525 = vpop.f32.mrf.mxu0
      %v526 = vadd.f32 0.0, %v525
      %v527 = vpop.f32.mrf.mxu0
      %v528 = vadd.f32 0.0, %v527
      %529 = vdwg.mxu0
      %vm530 = vcmask 261120
      %531 = vst.msk [vmem:[%s240] sm:$0xff] %vm530, %v451
      %532 = vst.msk [vmem:[%s240 + $0x8] sm:$0xff] %vm530, %v453
      %533 = vst.msk [vmem:[%s240 + $0x10] sm:$0xff] %vm530, %v456
      %534 = vst.msk [vmem:[%s240 + $0x18] sm:$0xff] %vm530, %v458
      %535 = vst.msk [vmem:[%s240 + $0x20] sm:$0xff] %vm530, %v461
      %536 = vst.msk [vmem:[%s240 + $0x28] sm:$0xff] %vm530, %v463
      %537 = vst.msk [vmem:[%s240 + $0x30] sm:$0xff] %vm530, %v466
      %538 = vst.msk [vmem:[%s240 + $0x38] sm:$0xff] %vm530, %v468
      %539 = vst.msk [vmem:[%s240 + $0x40] sm:$0xff] %vm530, %v471
      %540 = vst.msk [vmem:[%s240 + $0x48] sm:$0xff] %vm530, %v473
      %541 = vst.msk [vmem:[%s240 + $0x50] sm:$0xff] %vm530, %v476
      %542 = vst.msk [vmem:[%s240 + $0x58] sm:$0xff] %vm530, %v478
      %543 = vst.msk [vmem:[%s240 + $0x60] sm:$0xff] %vm530, %v481
      %544 = vst.msk [vmem:[%s240 + $0x68] sm:$0xff] %vm530, %v483
      %545 = vst.msk [vmem:[%s240 + $0x70] sm:$0xff] %vm530, %v486
      %546 = vst.msk [vmem:[%s240 + $0x78] sm:$0xff] %vm530, %v488
      %547 = vst.msk [vmem:[%s240 + $0x80] sm:$0xff] %vm530, %v491
      %548 = vst.msk [vmem:[%s240 + $0x88] sm:$0xff] %vm530, %v493
      %549 = vst.msk [vmem:[%s240 + $0x90] sm:$0xff] %vm530, %v496
      %550 = vst.msk [vmem:[%s240 + $0x98] sm:$0xff] %vm530, %v498
      %551 = vst.msk [vmem:[%s240 + $0xa0] sm:$0xff] %vm530, %v501
      %552 = vst.msk [vmem:[%s240 + $0xa8] sm:$0xff] %vm530, %v503
      %553 = vst.msk [vmem:[%s240 + $0xb0] sm:$0xff] %vm530, %v506
      %554 = vst.msk [vmem:[%s240 + $0xb8] sm:$0xff] %vm530, %v508
      %555 = vst.msk [vmem:[%s240 + $0xc0] sm:$0xff] %vm530, %v511
      %556 = vst.msk [vmem:[%s240 + $0xc8] sm:$0xff] %vm530, %v513
      %557 = vst.msk [vmem:[%s240 + $0xd0] sm:$0xff] %vm530, %v516
      %558 = vst.msk [vmem:[%s240 + $0xd8] sm:$0xff] %vm530, %v518
      %559 = vst.msk [vmem:[%s240 + $0xe0] sm:$0xff] %vm530, %v521
      %560 = vst.msk [vmem:[%s240 + $0xe8] sm:$0xff] %vm530, %v523
      %561 = vst.msk [vmem:[%s240 + $0xf0] sm:$0xff] %vm530, %v526
      %562 = vst.msk [vmem:[%s240 + $0xf8] sm:$0xff] %vm530, %v528
      %v563 = vsel %vm530, %v451, 0.0
      %v564 = vsel %vm530, %v453, 0.0
      %v565 = vadd.f32 %v563, %v564
      %v566 = vsel %vm530, %v456, 0.0
      %v567 = vadd.f32 %v565, %v566
      %v568 = vsel %vm530, %v458, 0.0
      %v569 = vadd.f32 %v567, %v568
      %v570 = vsel %vm530, %v461, 0.0
      %v571 = vadd.f32 %v569, %v570
      %v572 = vsel %vm530, %v463, 0.0
      %v573 = vadd.f32 %v571, %v572
      %v574 = vsel %vm530, %v466, 0.0
      %v575 = vadd.f32 %v573, %v574
      %v576 = vsel %vm530, %v468, 0.0
      %v577 = vadd.f32 %v575, %v576
      %v578 = vsel %vm530, %v471, 0.0
      %v579 = vadd.f32 %v577, %v578
      %v580 = vsel %vm530, %v473, 0.0
      %v581 = vadd.f32 %v579, %v580
      %v582 = vsel %vm530, %v476, 0.0
      %v583 = vadd.f32 %v581, %v582
      %v584 = vsel %vm530, %v478, 0.0
      %v585 = vadd.f32 %v583, %v584
      %v586 = vsel %vm530, %v481, 0.0
      %v587 = vadd.f32 %v585, %v586
      %v588 = vsel %vm530, %v483, 0.0
      %v589 = vadd.f32 %v587, %v588
      %v590 = vsel %vm530, %v486, 0.0
      %v591 = vadd.f32 %v589, %v590
      %v592 = vsel %vm530, %v488, 0.0
      %v593 = vadd.f32 %v591, %v592
      %v594 = vsel %vm530, %v491, 0.0
      %v595 = vadd.f32 %v593, %v594
      %v596 = vsel %vm530, %v493, 0.0
      %v597 = vadd.f32 %v595, %v596
      %v598 = vsel %vm530, %v496, 0.0
      %v599 = vadd.f32 %v597, %v598
      %v600 = vsel %vm530, %v498, 0.0
      %v601 = vadd.f32 %v599, %v600
      %v602 = vsel %vm530, %v501, 0.0
      %v603 = vadd.f32 %v601, %v602
      %v604 = vsel %vm530, %v503, 0.0
      %v605 = vadd.f32 %v603, %v604
      %v606 = vsel %vm530, %v506, 0.0
      %v607 = vadd.f32 %v605, %v606
      %v608 = vsel %vm530, %v508, 0.0
      %v609 = vadd.f32 %v607, %v608
      %v610 = vsel %vm530, %v511, 0.0
      %v611 = vadd.f32 %v609, %v610
      %v612 = vsel %vm530, %v513, 0.0
      %v613 = vadd.f32 %v611, %v612
      %v614 = vsel %vm530, %v516, 0.0
      %v615 = vadd.f32 %v613, %v614
      %v616 = vsel %vm530, %v518, 0.0
      %v617 = vadd.f32 %v615, %v616
      %v618 = vsel %vm530, %v521, 0.0
      %v619 = vadd.f32 %v617, %v618
      %v620 = vsel %vm530, %v523, 0.0
      %v621 = vadd.f32 %v619, %v620
      %v622 = vsel %vm530, %v526, 0.0
      %v623 = vadd.f32 %v621, %v622
      %v624 = vsel %vm530, %v528, 0.0
      %v625 = vadd.f32 %v623, %v624
      %v626 = vrot.slane %v625, 4
      %v627 = vadd.f32 %v625, %v626
      %v628 = vrot.slane %v627, 2
      %v629 = vadd.f32 %v627, %v628
      %v630 = vrot.slane %v629, 1
      %v631 = vadd.f32 %v629, %v630
      %vm632 = vcmask 253952
      %633 = vst.msk [vmem:[%s248] sm:$0x1] %vm632, %v631
      %v634 = vmul.f32 %v451, %v451
      %v635 = vmul.f32 %v453, %v453
      %v636 = vmul.f32 %v456, %v456
      %v637 = vmul.f32 %v458, %v458
      %v638 = vmul.f32 %v461, %v461
      %v639 = vmul.f32 %v463, %v463
      %v640 = vmul.f32 %v466, %v466
      %v641 = vmul.f32 %v468, %v468
      %v642 = vmul.f32 %v471, %v471
      %v643 = vmul.f32 %v473, %v473
      %v644 = vmul.f32 %v476, %v476
      %v645 = vmul.f32 %v478, %v478
      %v646 = vmul.f32 %v481, %v481
      %v647 = vmul.f32 %v483, %v483
      %v648 = vmul.f32 %v486, %v486
      %v649 = vmul.f32 %v488, %v488
      %v650 = vmul.f32 %v491, %v491
      %v651 = vmul.f32 %v493, %v493
      %v652 = vmul.f32 %v496, %v496
      %v653 = vmul.f32 %v498, %v498
      %v654 = vmul.f32 %v501, %v501
      %v655 = vmul.f32 %v503, %v503
      %v656 = vmul.f32 %v506, %v506
      %v657 = vmul.f32 %v508, %v508
      %v658 = vmul.f32 %v511, %v511
      %v659 = vmul.f32 %v513, %v513
      %v660 = vmul.f32 %v516, %v516
      %v661 = vmul.f32 %v518, %v518
      %v662 = vmul.f32 %v521, %v521
      %v663 = vmul.f32 %v523, %v523
      %v664 = vmul.f32 %v526, %v526
      %v665 = vmul.f32 %v528, %v528
      %v666 = vsel %vm530, %v634, 0.0
      %v667 = vsel %vm530, %v635, 0.0
      %v668 = vadd.f32 %v666, %v667
      %v669 = vsel %vm530, %v636, 0.0
      %v670 = vadd.f32 %v668, %v669
      %v671 = vsel %vm530, %v637, 0.0
      %v672 = vadd.f32 %v670, %v671
      %v673 = vsel %vm530, %v638, 0.0
      %v674 = vadd.f32 %v672, %v673
      %v675 = vsel %vm530, %v639, 0.0
      %v676 = vadd.f32 %v674, %v675
      %v677 = vsel %vm530, %v640, 0.0
      %v678 = vadd.f32 %v676, %v677
      %v679 = vsel %vm530, %v641, 0.0
      %v680 = vadd.f32 %v678, %v679
      %v681 = vsel %vm530, %v642, 0.0
      %v682 = vadd.f32 %v680, %v681
      %v683 = vsel %vm530, %v643, 0.0
      %v684 = vadd.f32 %v682, %v683
      %v685 = vsel %vm530, %v644, 0.0
      %v686 = vadd.f32 %v684, %v685
      %v687 = vsel %vm530, %v645, 0.0
      %v688 = vadd.f32 %v686, %v687
      %v689 = vsel %vm530, %v646, 0.0
      %v690 = vadd.f32 %v688, %v689
      %v691 = vsel %vm530, %v647, 0.0
      %v692 = vadd.f32 %v690, %v691
      %v693 = vsel %vm530, %v648, 0.0
      %v694 = vadd.f32 %v692, %v693
      %v695 = vsel %vm530, %v649, 0.0
      %v696 = vadd.f32 %v694, %v695
      %v697 = vsel %vm530, %v650, 0.0
      %v698 = vadd.f32 %v696, %v697
      %v699 = vsel %vm530, %v651, 0.0
      %v700 = vadd.f32 %v698, %v699
      %v701 = vsel %vm530, %v652, 0.0
      %v702 = vadd.f32 %v700, %v701
      %v703 = vsel %vm530, %v653, 0.0
      %v704 = vadd.f32 %v702, %v703
      %v705 = vsel %vm530, %v654, 0.0
      %v706 = vadd.f32 %v704, %v705
      %v707 = vsel %vm530, %v655, 0.0
      %v708 = vadd.f32 %v706, %v707
      %v709 = vsel %vm530, %v656, 0.0
      %v710 = vadd.f32 %v708, %v709
      %v711 = vsel %vm530, %v657, 0.0
      %v712 = vadd.f32 %v710, %v711
      %v713 = vsel %vm530, %v658, 0.0
      %v714 = vadd.f32 %v712, %v713
      %v715 = vsel %vm530, %v659, 0.0
      %v716 = vadd.f32 %v714, %v715
      %v717 = vsel %vm530, %v660, 0.0
      %v718 = vadd.f32 %v716, %v717
      %v719 = vsel %vm530, %v661, 0.0
      %v720 = vadd.f32 %v718, %v719
      %v721 = vsel %vm530, %v662, 0.0
      %v722 = vadd.f32 %v720, %v721
      %v723 = vsel %vm530, %v663, 0.0
      %v724 = vadd.f32 %v722, %v723
      %v725 = vsel %vm530, %v664, 0.0
      %v726 = vadd.f32 %v724, %v725
      %v727 = vsel %vm530, %v665, 0.0
      %v728 = vadd.f32 %v726, %v727
      %v729 = vrot.slane %v728, 4
      %v730 = vadd.f32 %v728, %v729
      %v731 = vrot.slane %v730, 2
      %v732 = vadd.f32 %v730, %v731
      %v733 = vrot.slane %v732, 1
      %v734 = vadd.f32 %v732, %v733
      %735 = vst.msk [vmem:[%s248 + $0x1] sm:$0x1] %vm632, %v734
      %s736 = smul.u32 32, %s20
      %p737 = scmp.lt.s32.totalorder %s19, 1
      %s738 = scalar_select %p737, %s19, 1
      %p739 = scmp.lt.s32.totalorder %s736, 31
      %s740 = scalar_select %p739, %s736, 31
      %s741 = smul.addr %s738, 32
      %s742 = sadd.s32 %s740, %s741
      %s743 = smul.addr %s742, 8
      %s744 = scalar_lea.vmem %s2, %s743
      %p745 = scmp.lt.s32.totalorder %s19, 1
      %s746 = scalar_select %p745, %s19, 1
      %p747 = scmp.lt.s32.totalorder %s20, 0
      %s748 = scalar_select %p747, %s20, 0
      %s749 = sadd.s32 %s748, %s746
      %s750 = smul.addr %s749, 2
      %s751 = scalar_lea.vmem %s3, %s750
      // Predicated region
      $region29: #{forward.4} parent=27 // pred_check
        %p752 = pneg %p101
      $region30: #{forward.4} parent=27 // pred_check_branch
        %754 = sbr.rel (%p752) target = $region32
      $region31: #{forward.4} parent=27 // pred_region
        %s755 = smul.u32 32, %s20
      $region32: #{forward.4} parent=27 // pred_fallthru
        _
      // Predicated region
      $region33: #{forward.4} parent=27 // pred_check
        %p756 = pneg %p129
      $region34: #{forward.4} parent=27 // pred_check_branch
        %758 = sbr.rel (%p756) target = $region36
      $region35: #{forward.4} parent=27 // pred_region
        _
      $region36: #{forward.4} parent=27 // pred_fallthru
        _
    $region28: #{forward.4} parent=5 // pred_fallthru
      _
    %p759 = scmp.le.s32.totalorder 2, %s10
    // Predicated region
    $region37: #{forward.4} parent=5 // pred_check
      %p760 = pneg %p759
    $region38: #{forward.4} parent=5 // pred_check_branch
      %762 = sbr.rel (%p760) target = $region40
    $region39: #{forward.4} parent=5 // pred_region
      %s763 = ssub.s32 %s10, 2
      // Predicated region
      $region41: #{forward.4} parent=39 // pred_check
        %p764 = pneg %p107
      $region42: #{forward.4} parent=39 // pred_check_branch
        %766 = sbr.rel (%p764) target = $region44
      $region43: #{forward.4} parent=39 // pred_region
        %s767 = smul.u32 32, %s22
        %p768 = scmp.lt.s32.totalorder %s21, 1
        %s769 = scalar_select %p768, %s21, 1
        %p770 = scmp.lt.s32.totalorder %s767, 31
        %s771 = scalar_select %p770, %s767, 31
        %s772 = smul.addr %s769, 32
        %s773 = sadd.s32 %s771, %s772
        %s774 = smul.addr %s773, 8
        %s775 = scalar_lea.vmem %s2, %s774
      $region44: #{forward.4} parent=39 // pred_fallthru
        _
      // Predicated region
      $region45: #{forward.4} parent=39 // pred_check
        %p776 = pneg %p135
      $region46: #{forward.4} parent=39 // pred_check_branch
        %778 = sbr.rel (%p776) target = $region48
      $region47: #{forward.4} parent=39 // pred_region
        %p779 = scmp.lt.s32.totalorder %s21, 1
        %s780 = scalar_select %p779, %s21, 1
        %p781 = scmp.lt.s32.totalorder %s22, 0
        %s782 = scalar_select %p781, %s22, 0
        %s783 = sadd.s32 %s782, %s780
        %s784 = smul.addr %s783, 2
        %s785 = scalar_lea.vmem %s3, %s784
      $region48: #{forward.4} parent=39 // pred_fallthru
        _
    $region40: #{forward.4} parent=5 // pred_fallthru
      _
  $region6: #{forward.4} parent=0 // loop_footer
    %s14 = sadd.s32 1, %s10
  $region7: #{forward.4} parent=0 // loop_footer_branch
    %9 = sbr.rel target = $region3
  $region8: #{forward.4} parent=0 // loop_exit
    _

// kernel: forward.5
$region0: #{forward.5}
  #allocation0 [shape = 'u32[]', space=smem, size = 0x4, offset = 0x4, fixed_abs, tag = 'smem constant byte address 0x4 - core index']
  #allocation1 [shape = 'u32[72,128]{1,0:T(1,128)}', space=vmem, size = 0x9000, scoped, tag = 'internal scratch']
  %s0 = inlined_call_operand.vmem [shape: f32[2,16,8,32], index: 0, kind: input, shape index: {}]
  %s1 = inlined_call_operand.vmem [shape: f32[1,32], index: 1, kind: input, shape index: {}]
  %s2 = inlined_call_operand.vmem [shape: f32[1,32], index: 2, kind: input, shape index: {}]
  %s3 = inlined_call_operand.vmem [shape: f32[2,16,32], index: 3, kind: output, shape index: {}]
  %s4 = sld [smem:[#allocation0]]
  $region45: #{forward.5} parent=0
    _
  %s6 = ssub.s32 1, %s4
  %s7 = scalar_select 0, %s6, %s4
  loop: start=0, step=1, limit=4
  $region2: #{forward.5} parent=0 // loop_pre_header
    _
  $region3: #{forward.5} parent=0 // loop_header
    %s9 = sphi 0, %s13
    %p10 = scmp.ge.s32.totalorder %s9, 4
    %s19 = sphi 0, %s21
    %s22 = sphi 0, %s19
    %s23 = sphi 0, %s22
    %s39 = sphi 0, %s23
    %s43 = sphi 0, %s43
    %s45 = sphi 0, %s43
    %s46 = sphi 0, %s45
    %s60 = sphi 0, %s46
    %s64 = sphi 0, %s64
    %s66 = sphi 0, %s64
    %s67 = sphi 0, %s66
    %s81 = sphi 0, %s67
    %s87 = sphi 0, %s89
    %s90 = sphi 0, %s87
    %s91 = sphi 0, %s90
    %s107 = sphi 0, %s91
  $region4: #{forward.5} parent=0 // loop_header_branch
    %12 = sbr.rel (%p10) target = $region8
  $region5: #{forward.5} parent=0 // loop_body
    %s14 = ssub.s32 %s9, 1
    %s15 = ssub.s32 %s9, 2
    %s16 = sadd.s32 %s9, 1
    %s17 = ssub.s32 %s9, %s16
    %p18 = scmp.eq.s32.totalorder %s17, 0
    %s20 = sadd.s32 %s19, 1
    %s21 = scalar_select %p18, %s19, %s20
    %p24 = pneg %p18
    %p25 = scmp.eq.s32.totalorder %s9, 1
    %p26 = por %p24, %p25
    %p27 = scmp.ne.s32.totalorder %s19, %s22
    %p28 = scmp.eq.s32.totalorder %s9, 0
    %p29 = por %p27, %p28
    %p30 = scmp.ne.s32.totalorder %s19, %s22
    %p31 = scmp.eq.s32.totalorder %s14, 1
    %p32 = por %p30, %p31
    %p33 = scmp.ne.s32.totalorder %s22, %s23
    %p34 = scmp.eq.s32.totalorder %s14, 0
    %p35 = por %p33, %p34
    %p36 = scmp.ne.s32.totalorder %s22, %s23
    %p37 = scmp.eq.s32.totalorder %s15, 1
    %p38 = por %p36, %p37
    %p40 = scmp.ne.s32.totalorder %s23, %s39
    %p41 = scmp.eq.s32.totalorder %s15, 0
    %p42 = por %p40, %p41
    %s44 = sadd.s32 %s43, 1
    %p47 = scmp.eq.s32.totalorder %s9, 1
    %p48 = scmp.ne.s32.totalorder %s43, %s45
    %p49 = scmp.eq.s32.totalorder %s9, 0
    %p50 = por %p48, %p49
    %p51 = scmp.ne.s32.totalorder %s43, %s45
    %p52 = scmp.eq.s32.totalorder %s14, 1
    %p53 = por %p51, %p52
    %p54 = scmp.ne.s32.totalorder %s45, %s46
    %p55 = scmp.eq.s32.totalorder %s14, 0
    %p56 = por %p54, %p55
    %p57 = scmp.ne.s32.totalorder %s45, %s46
    %p58 = scmp.eq.s32.totalorder %s15, 1
    %p59 = por %p57, %p58
    %p61 = scmp.ne.s32.totalorder %s46, %s60
    %p62 = scmp.eq.s32.totalorder %s15, 0
    %p63 = por %p61, %p62
    %s65 = sadd.s32 %s64, 1
    %p68 = scmp.eq.s32.totalorder %s9, 1
    %p69 = scmp.ne.s32.totalorder %s64, %s66
    %p70 = scmp.eq.s32.totalorder %s9, 0
    %p71 = por %p69, %p70
    %p72 = scmp.ne.s32.totalorder %s64, %s66
    %p73 = scmp.eq.s32.totalorder %s14, 1
    %p74 = por %p72, %p73
    %p75 = scmp.ne.s32.totalorder %s66, %s67
    %p76 = scmp.eq.s32.totalorder %s14, 0
    %p77 = por %p75, %p76
    %p78 = scmp.ne.s32.totalorder %s66, %s67
    %p79 = scmp.eq.s32.totalorder %s15, 1
    %p80 = por %p78, %p79
    %p82 = scmp.ne.s32.totalorder %s67, %s81
    %p83 = scmp.eq.s32.totalorder %s15, 0
    %p84 = por %p82, %p83
    %s85 = ssub.s32 %s9, %s16
    %p86 = scmp.eq.s32.totalorder %s85, 0
    %s88 = sadd.s32 %s87, 1
    %s89 = scalar_select %p86, %s87, %s88
    %p92 = pneg %p86
    %p93 = scmp.eq.s32.totalorder %s9, 1
    %p94 = por %p92, %p93
    %p95 = scmp.ne.s32.totalorder %s87, %s90
    %p96 = scmp.eq.s32.totalorder %s9, 0
    %p97 = por %p95, %p96
    %p98 = scmp.ne.s32.totalorder %s87, %s90
    %p99 = scmp.eq.s32.totalorder %s14, 1
    %p100 = por %p98, %p99
    %p101 = scmp.ne.s32.totalorder %s90, %s91
    %p102 = scmp.eq.s32.totalorder %s14, 0
    %p103 = por %p101, %p102
    %p104 = scmp.ne.s32.totalorder %s90, %s91
    %p105 = scmp.eq.s32.totalorder %s15, 1
    %p106 = por %p104, %p105
    %p108 = scmp.ne.s32.totalorder %s91, %s107
    %p109 = scmp.eq.s32.totalorder %s15, 0
    %p110 = por %p108, %p109
    %p111 = scmp.le.s32.totalorder 1, %s9
    %p112 = scmp.lt.s32.totalorder %s9, 3
    %p113 = pnand %p111, %p112
    %p114 = pneg %p113
    // Predicated region
    $region9: #{forward.5} parent=5 // pred_check
      _
    $region10: #{forward.5} parent=5 // pred_check_branch
      %116 = sbr.rel (%p113) target = $region12
    $region11: #{forward.5} parent=5 // pred_region
      %s117 = ssub.s32 %s9, 1
      // Predicated region
      $region13: #{forward.5} parent=11 // pred_check
        %p118 = pneg %p56
      $region14: #{forward.5} parent=11 // pred_check_branch
        %120 = sbr.rel (%p118) target = $region16
      $region15: #{forward.5} parent=11 // pred_region
        _
      $region16: #{forward.5} parent=11 // pred_fallthru
        _
      // Predicated region
      $region17: #{forward.5} parent=11 // pred_check
        %p121 = pneg %p77
      $region18: #{forward.5} parent=11 // pred_check_branch
        %123 = sbr.rel (%p121) target = $region20
      $region19: #{forward.5} parent=11 // pred_region
        _
      $region20: #{forward.5} parent=11 // pred_fallthru
        _
    $region12: #{forward.5} parent=5 // pred_fallthru
      _
    %p124 = scmp.lt.s32.totalorder %s9, 2
    // Predicated region
    $region21: #{forward.5} parent=5 // pred_check
      %p125 = pneg %p124
    $region22: #{forward.5} parent=5 // pred_check_branch
      %127 = sbr.rel (%p125) target = $region24
    $region23: #{forward.5} parent=5 // pred_region
      // Predicated region
      $region25: #{forward.5} parent=23 // pred_check
        %p128 = pneg %p29
      $region26: #{forward.5} parent=23 // pred_check_branch
        %130 = sbr.rel (%p128) target = $region28
      $region27: #{forward.5} parent=23 // pred_region
        %p131 = scmp.lt.s32.totalorder %s9, 1
        %s132 = scalar_select %p131, %s9, 1
        %s133 = smul.addr %s132, 16
        %s134 = smul.addr %s133, 8
        %s135 = scalar_lea.vmem %s0, %s134
      $region28: #{forward.5} parent=23 // pred_fallthru
        _
    $region24: #{forward.5} parent=5 // pred_fallthru
      _
    %p136 = scmp.le.s32.totalorder 1, %s9
    %p137 = scmp.lt.s32.totalorder %s9, 3
    %p138 = pnand %p136, %p137
    %p139 = pneg %p138
    // Predicated region
    $region29: #{forward.5} parent=5 // pred_check
      _
    $region30: #{forward.5} parent=5 // pred_check_branch
      %141 = sbr.rel (%p138) target = $region32
    $region31: #{forward.5} parent=5 // pred_region
      %s142 = ssub.s32 %s9, 1
      %p143 = scmp.lt.s32.totalorder %s14, 1
      %s144 = scalar_select %p143, %s14, 1
      %s145 = smul.addr %s144, 16
      %s146 = smul.addr %s145, 8
      %s147 = scalar_lea.vmem %s0, %s146
      %p148 = pneg %p35
      %p149 = pneg %p32
      %p150 = pneg %p56
      %p151 = pneg %p53
      %p152 = pneg %p77
      %p153 = pneg %p74
      %p154 = pneg %p103
      %p155 = pneg %p100
      %p156 = scmp.lt.s32.totalorder %s14, 1
      %s157 = scalar_select %p156, %s14, 1
      %s158 = smul.addr %s157, 2
      %s159 = smul.addr %s158, 8
      %s160 = scalar_lea.vmem %s3, %s159
      %p161 = scmp.lt.s32.totalorder %s14, 1
      %s162 = scalar_select %p161, %s14, 1
      %s163 = smul.addr %s162, 16
      %s164 = smul.addr %s163, 8
      %s165 = scalar_lea.vmem %s0, %s164
      %p166 = scmp.lt.s32.totalorder %s14, 1
      %s167 = scalar_select %p166, %s14, 1
      %s168 = smul.addr %s167, 2
      %s169 = smul.addr %s168, 8
      %s170 = scalar_lea.vmem %s3, %s169
      %v171 = vld [vmem:[%s1] sm:$0x1]
      %v172 = vld [vmem:[%s2] sm:$0x1]
      %v173 = vld [vmem:[%s165] sm:$0x1]
      %v174 = vld [vmem:[%s165 + $0x8] sm:$0x1]
      %v175 = vld [vmem:[%s165 + $0x10] sm:$0x1]
      %v176 = vld [vmem:[%s165 + $0x18] sm:$0x1]
      %v177 = vld [vmem:[%s165 + $0x20] sm:$0x1]
      %v178 = vld [vmem:[%s165 + $0x28] sm:$0x1]
      %v179 = vld [vmem:[%s165 + $0x30] sm:$0x1]
      %v180 = vld [vmem:[%s165 + $0x38] sm:$0x1]
      %v181 = vld [vmem:[%s165 + $0x40] sm:$0x1]
      %v182 = vld [vmem:[%s165 + $0x48] sm:$0x1]
      %v183 = vld [vmem:[%s165 + $0x50] sm:$0x1]
      %v184 = vld [vmem:[%s165 + $0x58] sm:$0x1]
      %v185 = vld [vmem:[%s165 + $0x60] sm:$0x1]
      %v186 = vld [vmem:[%s165 + $0x68] sm:$0x1]
      %v187 = vld [vmem:[%s165 + $0x70] sm:$0x1]
      %v188 = vld [vmem:[%s165 + $0x78] sm:$0x1]
      %v190 = vperm.slane %v171, 0
      %v192 = vmul.f32 %v173, %v190
      %v193 = vmul.f32 %v174, %v190
      %v194 = vmul.f32 %v175, %v190
      %v195 = vmul.f32 %v176, %v190
      %v196 = vmul.f32 %v177, %v190
      %v197 = vmul.f32 %v178, %v190
      %v198 = vmul.f32 %v179, %v190
      %v199 = vmul.f32 %v180, %v190
      %v200 = vmul.f32 %v181, %v190
      %v201 = vmul.f32 %v182, %v190
      %v202 = vmul.f32 %v183, %v190
      %v203 = vmul.f32 %v184, %v190
      %v204 = vmul.f32 %v185, %v190
      %v205 = vmul.f32 %v186, %v190
      %v206 = vmul.f32 %v187, %v190
      %v207 = vmul.f32 %v188, %v190
      %v209 = vperm.slane %v172, 0
      %v211 = vadd.f32 %v192, %v209
      %v212 = vadd.f32 %v193, %v209
      %v213 = vadd.f32 %v194, %v209
      %v214 = vadd.f32 %v195, %v209
      %v215 = vadd.f32 %v196, %v209
      %v216 = vadd.f32 %v197, %v209
      %v217 = vadd.f32 %v198, %v209
      %v218 = vadd.f32 %v199, %v209
      %v219 = vadd.f32 %v200, %v209
      %v220 = vadd.f32 %v201, %v209
      %v221 = vadd.f32 %v202, %v209
      %v222 = vadd.f32 %v203, %v209
      %v223 = vadd.f32 %v204, %v209
      %v224 = vadd.f32 %v205, %v209
      %v225 = vadd.f32 %v206, %v209
      %v226 = vadd.f32 %v207, %v209
      %v227 = vld [vmem:[%s165 + $0x1] sm:$0x1]
      %v228 = vld [vmem:[%s165 + $0x9] sm:$0x1]
      %v229 = vld [vmem:[%s165 + $0x11] sm:$0x1]
      %v230 = vld [vmem:[%s165 + $0x19] sm:$0x1]
      %v231 = vld [vmem:[%s165 + $0x21] sm:$0x1]
      %v232 = vld [vmem:[%s165 + $0x29] sm:$0x1]
      %v233 = vld [vmem:[%s165 + $0x31] sm:$0x1]
      %v234 = vld [vmem:[%s165 + $0x39] sm:$0x1]
      %v235 = vld [vmem:[%s165 + $0x41] sm:$0x1]
      %v236 = vld [vmem:[%s165 + $0x49] sm:$0x1]
      %v237 = vld [vmem:[%s165 + $0x51] sm:$0x1]
      %v238 = vld [vmem:[%s165 + $0x59] sm:$0x1]
      %v239 = vld [vmem:[%s165 + $0x61] sm:$0x1]
      %v240 = vld [vmem:[%s165 + $0x69] sm:$0x1]
      %v241 = vld [vmem:[%s165 + $0x71] sm:$0x1]
      %v242 = vld [vmem:[%s165 + $0x79] sm:$0x1]
      %v243 = vmul.f32 %v227, %v190
      %v244 = vmul.f32 %v228, %v190
      %v245 = vmul.f32 %v229, %v190
      %v246 = vmul.f32 %v230, %v190
      %v247 = vmul.f32 %v231, %v190
      %v248 = vmul.f32 %v232, %v190
      %v249 = vmul.f32 %v233, %v190
      %v250 = vmul.f32 %v234, %v190
      %v251 = vmul.f32 %v235, %v190
      %v252 = vmul.f32 %v236, %v190
      %v253 = vmul.f32 %v237, %v190
      %v254 = vmul.f32 %v238, %v190
      %v255 = vmul.f32 %v239, %v190
      %v256 = vmul.f32 %v240, %v190
      %v257 = vmul.f32 %v241, %v190
      %v258 = vmul.f32 %v242, %v190
      %v259 = vadd.f32 %v243, %v209
      %v260 = vadd.f32 %v244, %v209
      %v261 = vadd.f32 %v245, %v209
      %v262 = vadd.f32 %v246, %v209
      %v263 = vadd.f32 %v247, %v209
      %v264 = vadd.f32 %v248, %v209
      %v265 = vadd.f32 %v249, %v209
      %v266 = vadd.f32 %v250, %v209
      %v267 = vadd.f32 %v251, %v209
      %v268 = vadd.f32 %v252, %v209
      %v269 = vadd.f32 %v253, %v209
      %v270 = vadd.f32 %v254, %v209
      %v271 = vadd.f32 %v255, %v209
      %v272 = vadd.f32 %v256, %v209
      %v273 = vadd.f32 %v257, %v209
      %v274 = vadd.f32 %v258, %v209
      %v275 = vmax.f32 %v211, %v259
      %v276 = vmax.f32 %v212, %v260
      %v277 = vmax.f32 %v213, %v261
      %v278 = vmax.f32 %v214, %v262
      %v279 = vmax.f32 %v215, %v263
      %v280 = vmax.f32 %v216, %v264
      %v281 = vmax.f32 %v217, %v265
      %v282 = vmax.f32 %v218, %v266
      %v283 = vmax.f32 %v219, %v267
      %v284 = vmax.f32 %v220, %v268
      %v285 = vmax.f32 %v221, %v269
      %v286 = vmax.f32 %v222, %v270
      %v287 = vmax.f32 %v223, %v271
      %v288 = vmax.f32 %v224, %v272
      %v289 = vmax.f32 %v225, %v273
      %v290 = vmax.f32 %v226, %v274
      %v291 = vld [vmem:[%s165 + $0x2] sm:$0x1]
      %v292 = vld [vmem:[%s165 + $0xa] sm:$0x1]
      %v293 = vld [vmem:[%s165 + $0x12] sm:$0x1]
      %v294 = vld [vmem:[%s165 + $0x1a] sm:$0x1]
      %v295 = vld [vmem:[%s165 + $0x22] sm:$0x1]
      %v296 = vld [vmem:[%s165 + $0x2a] sm:$0x1]
      %v297 = vld [vmem:[%s165 + $0x32] sm:$0x1]
      %v298 = vld [vmem:[%s165 + $0x3a] sm:$0x1]
      %v299 = vld [vmem:[%s165 + $0x42] sm:$0x1]
      %v300 = vld [vmem:[%s165 + $0x4a] sm:$0x1]
      %v301 = vld [vmem:[%s165 + $0x52] sm:$0x1]
      %v302 = vld [vmem:[%s165 + $0x5a] sm:$0x1]
      %v303 = vld [vmem:[%s165 + $0x62] sm:$0x1]
      %v304 = vld [vmem:[%s165 + $0x6a] sm:$0x1]
      %v305 = vld [vmem:[%s165 + $0x72] sm:$0x1]
      %v306 = vld [vmem:[%s165 + $0x7a] sm:$0x1]
      %v307 = vmul.f32 %v291, %v190
      %v308 = vmul.f32 %v292, %v190
      %v309 = vmul.f32 %v293, %v190
      %v310 = vmul.f32 %v294, %v190
      %v311 = vmul.f32 %v295, %v190
      %v312 = vmul.f32 %v296, %v190
      %v313 = vmul.f32 %v297, %v190
      %v314 = vmul.f32 %v298, %v190
      %v315 = vmul.f32 %v299, %v190
      %v316 = vmul.f32 %v300, %v190
      %v317 = vmul.f32 %v301, %v190
      %v318 = vmul.f32 %v302, %v190
      %v319 = vmul.f32 %v303, %v190
      %v320 = vmul.f32 %v304, %v190
      %v321 = vmul.f32 %v305, %v190
      %v322 = vmul.f32 %v306, %v190
      %v323 = vadd.f32 %v307, %v209
      %v324 = vadd.f32 %v308, %v209
      %v325 = vadd.f32 %v309, %v209
      %v326 = vadd.f32 %v310, %v209
      %v327 = vadd.f32 %v311, %v209
      %v328 = vadd.f32 %v312, %v209
      %v329 = vadd.f32 %v313, %v209
      %v330 = vadd.f32 %v314, %v209
      %v331 = vadd.f32 %v315, %v209
      %v332 = vadd.f32 %v316, %v209
      %v333 = vadd.f32 %v317, %v209
      %v334 = vadd.f32 %v318, %v209
      %v335 = vadd.f32 %v319, %v209
      %v336 = vadd.f32 %v320, %v209
      %v337 = vadd.f32 %v321, %v209
      %v338 = vadd.f32 %v322, %v209
      %v339 = vmax.f32 %v275, %v323
      %v340 = vmax.f32 %v276, %v324
      %v341 = vmax.f32 %v277, %v325
      %v342 = vmax.f32 %v278, %v326
      %v343 = vmax.f32 %v279, %v327
      %v344 = vmax.f32 %v280, %v328
      %v345 = vmax.f32 %v281, %v329
      %v346 = vmax.f32 %v282, %v330
      %v347 = vmax.f32 %v283, %v331
      %v348 = vmax.f32 %v284, %v332
      %v349 = vmax.f32 %v285, %v333
      %v350 = vmax.f32 %v286, %v334
      %v351 = vmax.f32 %v287, %v335
      %v352 = vmax.f32 %v288, %v336
      %v353 = vmax.f32 %v289, %v337
      %v354 = vmax.f32 %v290, %v338
      %v355 = vld [vmem:[%s165 + $0x3] sm:$0x1]
      %v356 = vld [vmem:[%s165 + $0xb] sm:$0x1]
      %v357 = vld [vmem:[%s165 + $0x13] sm:$0x1]
      %v358 = vld [vmem:[%s165 + $0x1b] sm:$0x1]
      %v359 = vld [vmem:[%s165 + $0x23] sm:$0x1]
      %v360 = vld [vmem:[%s165 + $0x2b] sm:$0x1]
      %v361 = vld [vmem:[%s165 + $0x33] sm:$0x1]
      %v362 = vld [vmem:[%s165 + $0x3b] sm:$0x1]
      %v363 = vld [vmem:[%s165 + $0x43] sm:$0x1]
      %v364 = vld [vmem:[%s165 + $0x4b] sm:$0x1]
      %v365 = vld [vmem:[%s165 + $0x53] sm:$0x1]
      %v366 = vld [vmem:[%s165 + $0x5b] sm:$0x1]
      %v367 = vld [vmem:[%s165 + $0x63] sm:$0x1]
      %v368 = vld [vmem:[%s165 + $0x6b] sm:$0x1]
      %v369 = vld [vmem:[%s165 + $0x73] sm:$0x1]
      %v370 = vld [vmem:[%s165 + $0x7b] sm:$0x1]
      %v371 = vmul.f32 %v355, %v190
      %v372 = vmul.f32 %v356, %v190
      %v373 = vmul.f32 %v357, %v190
      %v374 = vmul.f32 %v358, %v190
      %v375 = vmul.f32 %v359, %v190
      %v376 = vmul.f32 %v360, %v190
      %v377 = vmul.f32 %v361, %v190
      %v378 = vmul.f32 %v362, %v190
      %v379 = vmul.f32 %v363, %v190
      %v380 = vmul.f32 %v364, %v190
      %v381 = vmul.f32 %v365, %v190
      %v382 = vmul.f32 %v366, %v190
      %v383 = vmul.f32 %v367, %v190
      %v384 = vmul.f32 %v368, %v190
      %v385 = vmul.f32 %v369, %v190
      %v386 = vmul.f32 %v370, %v190
      %v387 = vadd.f32 %v371, %v209
      %v388 = vadd.f32 %v372, %v209
      %v389 = vadd.f32 %v373, %v209
      %v390 = vadd.f32 %v374, %v209
      %v391 = vadd.f32 %v375, %v209
      %v392 = vadd.f32 %v376, %v209
      %v393 = vadd.f32 %v377, %v209
      %v394 = vadd.f32 %v378, %v209
      %v395 = vadd.f32 %v379, %v209
      %v396 = vadd.f32 %v380, %v209
      %v397 = vadd.f32 %v381, %v209
      %v398 = vadd.f32 %v382, %v209
      %v399 = vadd.f32 %v383, %v209
      %v400 = vadd.f32 %v384, %v209
      %v401 = vadd.f32 %v385, %v209
      %v402 = vadd.f32 %v386, %v209
      %v403 = vmax.f32 %v339, %v387
      %v404 = vmax.f32 %v340, %v388
      %v405 = vmax.f32 %v341, %v389
      %v406 = vmax.f32 %v342, %v390
      %v407 = vmax.f32 %v343, %v391
      %v408 = vmax.f32 %v344, %v392
      %v409 = vmax.f32 %v345, %v393
      %v410 = vmax.f32 %v346, %v394
      %v411 = vmax.f32 %v347, %v395
      %v412 = vmax.f32 %v348, %v396
      %v413 = vmax.f32 %v349, %v397
      %v414 = vmax.f32 %v350, %v398
      %v415 = vmax.f32 %v351, %v399
      %v416 = vmax.f32 %v352, %v400
      %v417 = vmax.f32 %v353, %v401
      %v418 = vmax.f32 %v354, %v402
      %v419 = vld [vmem:[%s165 + $0x4] sm:$0x1]
      %v420 = vld [vmem:[%s165 + $0xc] sm:$0x1]
      %v421 = vld [vmem:[%s165 + $0x14] sm:$0x1]
      %v422 = vld [vmem:[%s165 + $0x1c] sm:$0x1]
      %v423 = vld [vmem:[%s165 + $0x24] sm:$0x1]
      %v424 = vld [vmem:[%s165 + $0x2c] sm:$0x1]
      %v425 = vld [vmem:[%s165 + $0x34] sm:$0x1]
      %v426 = vld [vmem:[%s165 + $0x3c] sm:$0x1]
      %v427 = vld [vmem:[%s165 + $0x44] sm:$0x1]
      %v428 = vld [vmem:[%s165 + $0x4c] sm:$0x1]
      %v429 = vld [vmem:[%s165 + $0x54] sm:$0x1]
      %v430 = vld [vmem:[%s165 + $0x5c] sm:$0x1]
      %v431 = vld [vmem:[%s165 + $0x64] sm:$0x1]
      %v432 = vld [vmem:[%s165 + $0x6c] sm:$0x1]
      %v433 = vld [vmem:[%s165 + $0x74] sm:$0x1]
      %v434 = vld [vmem:[%s165 + $0x7c] sm:$0x1]
      %v435 = vmul.f32 %v419, %v190
      %v436 = vmul.f32 %v420, %v190
      %v437 = vmul.f32 %v421, %v190
      %v438 = vmul.f32 %v422, %v190
      %v439 = vmul.f32 %v423, %v190
      %v440 = vmul.f32 %v424, %v190
      %v441 = vmul.f32 %v425, %v190
      %v442 = vmul.f32 %v426, %v190
      %v443 = vmul.f32 %v427, %v190
      %v444 = vmul.f32 %v428, %v190
      %v445 = vmul.f32 %v429, %v190
      %v446 = vmul.f32 %v430, %v190
      %v447 = vmul.f32 %v431, %v190
      %v448 = vmul.f32 %v432, %v190
      %v449 = vmul.f32 %v433, %v190
      %v450 = vmul.f32 %v434, %v190
      %v451 = vadd.f32 %v435, %v209
      %v452 = vadd.f32 %v436, %v209
      %v453 = vadd.f32 %v437, %v209
      %v454 = vadd.f32 %v438, %v209
      %v455 = vadd.f32 %v439, %v209
      %v456 = vadd.f32 %v440, %v209
      %v457 = vadd.f32 %v441, %v209
      %v458 = vadd.f32 %v442, %v209
      %v459 = vadd.f32 %v443, %v209
      %v460 = vadd.f32 %v444, %v209
      %v461 = vadd.f32 %v445, %v209
      %v462 = vadd.f32 %v446, %v209
      %v463 = vadd.f32 %v447, %v209
      %v464 = vadd.f32 %v448, %v209
      %v465 = vadd.f32 %v449, %v209
      %v466 = vadd.f32 %v450, %v209
      %v467 = vmax.f32 %v403, %v451
      %v468 = vmax.f32 %v404, %v452
      %v469 = vmax.f32 %v405, %v453
      %v470 = vmax.f32 %v406, %v454
      %v471 = vmax.f32 %v407, %v455
      %v472 = vmax.f32 %v408, %v456
      %v473 = vmax.f32 %v409, %v457
      %v474 = vmax.f32 %v410, %v458
      %v475 = vmax.f32 %v411, %v459
      %v476 = vmax.f32 %v412, %v460
      %v477 = vmax.f32 %v413, %v461
      %v478 = vmax.f32 %v414, %v462
      %v479 = vmax.f32 %v415, %v463
      %v480 = vmax.f32 %v416, %v464
      %v481 = vmax.f32 %v417, %v465
      %v482 = vmax.f32 %v418, %v466
      %v483 = vld [vmem:[%s165 + $0x5] sm:$0x1]
      %v484 = vld [vmem:[%s165 + $0xd] sm:$0x1]
      %v485 = vld [vmem:[%s165 + $0x15] sm:$0x1]
      %v486 = vld [vmem:[%s165 + $0x1d] sm:$0x1]
      %v487 = vld [vmem:[%s165 + $0x25] sm:$0x1]
      %v488 = vld [vmem:[%s165 + $0x2d] sm:$0x1]
      %v489 = vld [vmem:[%s165 + $0x35] sm:$0x1]
      %v490 = vld [vmem:[%s165 + $0x3d] sm:$0x1]
      %v491 = vld [vmem:[%s165 + $0x45] sm:$0x1]
      %v492 = vld [vmem:[%s165 + $0x4d] sm:$0x1]
      %v493 = vld [vmem:[%s165 + $0x55] sm:$0x1]
      %v494 = vld [vmem:[%s165 + $0x5d] sm:$0x1]
      %v495 = vld [vmem:[%s165 + $0x65] sm:$0x1]
      %v496 = vld [vmem:[%s165 + $0x6d] sm:$0x1]
      %v497 = vld [vmem:[%s165 + $0x75] sm:$0x1]
      %v498 = vld [vmem:[%s165 + $0x7d] sm:$0x1]
      %v499 = vmul.f32 %v483, %v190
      %v500 = vmul.f32 %v484, %v190
      %v501 = vmul.f32 %v485, %v190
      %v502 = vmul.f32 %v486, %v190
      %v503 = vmul.f32 %v487, %v190
      %v504 = vmul.f32 %v488, %v190
      %v505 = vmul.f32 %v489, %v190
      %v506 = vmul.f32 %v490, %v190
      %v507 = vmul.f32 %v491, %v190
      %v508 = vmul.f32 %v492, %v190
      %v509 = vmul.f32 %v493, %v190
      %v510 = vmul.f32 %v494, %v190
      %v511 = vmul.f32 %v495, %v190
      %v512 = vmul.f32 %v496, %v190
      %v513 = vmul.f32 %v497, %v190
      %v514 = vmul.f32 %v498, %v190
      %v515 = vadd.f32 %v499, %v209
      %v516 = vadd.f32 %v500, %v209
      %v517 = vadd.f32 %v501, %v209
      %v518 = vadd.f32 %v502, %v209
      %v519 = vadd.f32 %v503, %v209
      %v520 = vadd.f32 %v504, %v209
      %v521 = vadd.f32 %v505, %v209
      %v522 = vadd.f32 %v506, %v209
      %v523 = vadd.f32 %v507, %v209
      %v524 = vadd.f32 %v508, %v209
      %v525 = vadd.f32 %v509, %v209
      %v526 = vadd.f32 %v510, %v209
      %v527 = vadd.f32 %v511, %v209
      %v528 = vadd.f32 %v512, %v209
      %v529 = vadd.f32 %v513, %v209
      %v530 = vadd.f32 %v514, %v209
      %v531 = vmax.f32 %v467, %v515
      %v532 = vmax.f32 %v468, %v516
      %v533 = vmax.f32 %v469, %v517
      %v534 = vmax.f32 %v470, %v518
      %v535 = vmax.f32 %v471, %v519
      %v536 = vmax.f32 %v472, %v520
      %v537 = vmax.f32 %v473, %v521
      %v538 = vmax.f32 %v474, %v522
      %v539 = vmax.f32 %v475, %v523
      %v540 = vmax.f32 %v476, %v524
      %v541 = vmax.f32 %v477, %v525
      %v542 = vmax.f32 %v478, %v526
      %v543 = vmax.f32 %v479, %v527
      %v544 = vmax.f32 %v480, %v528
      %v545 = vmax.f32 %v481, %v529
      %v546 = vmax.f32 %v482, %v530
      %v547 = vld [vmem:[%s165 + $0x6] sm:$0x1]
      %v548 = vld [vmem:[%s165 + $0xe] sm:$0x1]
      %v549 = vld [vmem:[%s165 + $0x16] sm:$0x1]
      %v550 = vld [vmem:[%s165 + $0x1e] sm:$0x1]
      %v551 = vld [vmem:[%s165 + $0x26] sm:$0x1]
      %v552 = vld [vmem:[%s165 + $0x2e] sm:$0x1]
      %v553 = vld [vmem:[%s165 + $0x36] sm:$0x1]
      %v554 = vld [vmem:[%s165 + $0x3e] sm:$0x1]
      %v555 = vld [vmem:[%s165 + $0x46] sm:$0x1]
      %v556 = vld [vmem:[%s165 + $0x4e] sm:$0x1]
      %v557 = vld [vmem:[%s165 + $0x56] sm:$0x1]
      %v558 = vld [vmem:[%s165 + $0x5e] sm:$0x1]
      %v559 = vld [vmem:[%s165 + $0x66] sm:$0x1]
      %v560 = vld [vmem:[%s165 + $0x6e] sm:$0x1]
      %v561 = vld [vmem:[%s165 + $0x76] sm:$0x1]
      %v562 = vld [vmem:[%s165 + $0x7e] sm:$0x1]
      %v563 = vmul.f32 %v547, %v190
      %v564 = vmul.f32 %v548, %v190
      %v565 = vmul.f32 %v549, %v190
      %v566 = vmul.f32 %v550, %v190
      %v567 = vmul.f32 %v551, %v190
      %v568 = vmul.f32 %v552, %v190
      %v569 = vmul.f32 %v553, %v190
      %v570 = vmul.f32 %v554, %v190
      %v571 = vmul.f32 %v555, %v190
      %v572 = vmul.f32 %v556, %v190
      %v573 = vmul.f32 %v557, %v190
      %v574 = vmul.f32 %v558, %v190
      %v575 = vmul.f32 %v559, %v190
      %v576 = vmul.f32 %v560, %v190
      %v577 = vmul.f32 %v561, %v190
      %v578 = vmul.f32 %v562, %v190
      %v579 = vadd.f32 %v563, %v209
      %v580 = vadd.f32 %v564, %v209
      %v581 = vadd.f32 %v565, %v209
      %v582 = vadd.f32 %v566, %v209
      %v583 = vadd.f32 %v567, %v209
      %v584 = vadd.f32 %v568, %v209
      %v585 = vadd.f32 %v569, %v209
      %v586 = vadd.f32 %v570, %v209
      %v587 = vadd.f32 %v571, %v209
      %v588 = vadd.f32 %v572, %v209
      %v589 = vadd.f32 %v573, %v209
      %v590 = vadd.f32 %v574, %v209
      %v591 = vadd.f32 %v575, %v209
      %v592 = vadd.f32 %v576, %v209
      %v593 = vadd.f32 %v577, %v209
      %v594 = vadd.f32 %v578, %v209
      %v595 = vmax.f32 %v531, %v579
      %v596 = vmax.f32 %v532, %v580
      %v597 = vmax.f32 %v533, %v581
      %v598 = vmax.f32 %v534, %v582
      %v599 = vmax.f32 %v535, %v583
      %v600 = vmax.f32 %v536, %v584
      %v601 = vmax.f32 %v537, %v585
      %v602 = vmax.f32 %v538, %v586
      %v603 = vmax.f32 %v539, %v587
      %v604 = vmax.f32 %v540, %v588
      %v605 = vmax.f32 %v541, %v589
      %v606 = vmax.f32 %v542, %v590
      %v607 = vmax.f32 %v543, %v591
      %v608 = vmax.f32 %v544, %v592
      %v609 = vmax.f32 %v545, %v593
      %v610 = vmax.f32 %v546, %v594
      %v611 = vld [vmem:[%s165 + $0x7] sm:$0x1]
      %v612 = vld [vmem:[%s165 + $0xf] sm:$0x1]
      %v613 = vld [vmem:[%s165 + $0x17] sm:$0x1]
      %v614 = vld [vmem:[%s165 + $0x1f] sm:$0x1]
      %v615 = vld [vmem:[%s165 + $0x27] sm:$0x1]
      %v616 = vld [vmem:[%s165 + $0x2f] sm:$0x1]
      %v617 = vld [vmem:[%s165 + $0x37] sm:$0x1]
      %v618 = vld [vmem:[%s165 + $0x3f] sm:$0x1]
      %v619 = vld [vmem:[%s165 + $0x47] sm:$0x1]
      %v620 = vld [vmem:[%s165 + $0x4f] sm:$0x1]
      %v621 = vld [vmem:[%s165 + $0x57] sm:$0x1]
      %v622 = vld [vmem:[%s165 + $0x5f] sm:$0x1]
      %v623 = vld [vmem:[%s165 + $0x67] sm:$0x1]
      %v624 = vld [vmem:[%s165 + $0x6f] sm:$0x1]
      %v625 = vld [vmem:[%s165 + $0x77] sm:$0x1]
      %v626 = vld [vmem:[%s165 + $0x7f] sm:$0x1]
      %v627 = vmul.f32 %v611, %v190
      %v628 = vmul.f32 %v612, %v190
      %v629 = vmul.f32 %v613, %v190
      %v630 = vmul.f32 %v614, %v190
      %v631 = vmul.f32 %v615, %v190
      %v632 = vmul.f32 %v616, %v190
      %v633 = vmul.f32 %v617, %v190
      %v634 = vmul.f32 %v618, %v190
      %v635 = vmul.f32 %v619, %v190
      %v636 = vmul.f32 %v620, %v190
      %v637 = vmul.f32 %v621, %v190
      %v638 = vmul.f32 %v622, %v190
      %v639 = vmul.f32 %v623, %v190
      %v640 = vmul.f32 %v624, %v190
      %v641 = vmul.f32 %v625, %v190
      %v642 = vmul.f32 %v626, %v190
      %v643 = vadd.f32 %v627, %v209
      %v644 = vadd.f32 %v628, %v209
      %v645 = vadd.f32 %v629, %v209
      %v646 = vadd.f32 %v630, %v209
      %v647 = vadd.f32 %v631, %v209
      %v648 = vadd.f32 %v632, %v209
      %v649 = vadd.f32 %v633, %v209
      %v650 = vadd.f32 %v634, %v209
      %v651 = vadd.f32 %v635, %v209
      %v652 = vadd.f32 %v636, %v209
      %v653 = vadd.f32 %v637, %v209
      %v654 = vadd.f32 %v638, %v209
      %v655 = vadd.f32 %v639, %v209
      %v656 = vadd.f32 %v640, %v209
      %v657 = vadd.f32 %v641, %v209
      %v658 = vadd.f32 %v642, %v209
      %v659 = vmax.f32 %v595, %v643
      %v660 = vmax.f32 %v596, %v644
      %v661 = vmax.f32 %v597, %v645
      %v662 = vmax.f32 %v598, %v646
      %v663 = vmax.f32 %v599, %v647
      %v664 = vmax.f32 %v600, %v648
      %v665 = vmax.f32 %v601, %v649
      %v666 = vmax.f32 %v602, %v650
      %v667 = vmax.f32 %v603, %v651
      %v668 = vmax.f32 %v604, %v652
      %v669 = vmax.f32 %v605, %v653
      %v670 = vmax.f32 %v606, %v654
      %v671 = vmax.f32 %v607, %v655
      %v672 = vmax.f32 %v608, %v656
      %v673 = vmax.f32 %v609, %v657
      %v674 = vmax.f32 %v610, %v658
      %v675 = vmax.f32 %v659, 0.0
      %v676 = vmax.f32 %v660, 0.0
      %v677 = vmax.f32 %v661, 0.0
      %v678 = vmax.f32 %v662, 0.0
      %v679 = vmax.f32 %v663, 0.0
      %v680 = vmax.f32 %v664, 0.0
      %v681 = vmax.f32 %v665, 0.0
      %v682 = vmax.f32 %v666, 0.0
      %v683 = vmax.f32 %v667, 0.0
      %v684 = vmax.f32 %v668, 0.0
      %v685 = vmax.f32 %v669, 0.0
      %v686 = vmax.f32 %v670, 0.0
      %v687 = vmax.f32 %v671, 0.0
      %v688 = vmax.f32 %v672, 0.0
      %v689 = vmax.f32 %v673, 0.0
      %v690 = vmax.f32 %v674, 0.0
      %v707 = vrot.slane %v676, 7
      %vm708 = vcmask 1041409
      %v709 = vsel %vm708, %v707, %v675
      %v710 = vrot.slane %v677, 6
      %vm711 = vcmask 1042434
      %v712 = vsel %vm711, %v710, %v709
      %v713 = vrot.slane %v678, 5
      %vm714 = vcmask 1043459
      %v715 = vsel %vm714, %v713, %v712
      %v716 = vrot.slane %v679, 4
      %vm717 = vcmask 1044484
      %v718 = vsel %vm717, %v716, %v715
      %v719 = vrot.slane %v680, 3
      %vm720 = vcmask 1045509
      %v721 = vsel %vm720, %v719, %v718
      %v722 = vrot.slane %v681, 2
      %vm723 = vcmask 1046534
      %v724 = vsel %vm723, %v722, %v721
      %v725 = vrot.slane %v682, 1
      %vm726 = vcmask 1047559
      %v727 = vsel %vm726, %v725, %v724
      %v728 = vrot.slane %v684, 7
      %v729 = vsel %vm708, %v728, %v683
      %v730 = vrot.slane %v685, 6
      %v731 = vsel %vm711, %v730, %v729
      %v732 = vrot.slane %v686, 5
      %v733 = vsel %vm714, %v732, %v731
      %v734 = vrot.slane %v687, 4
      %v735 = vsel %vm717, %v734, %v733
      %v736 = vrot.slane %v688, 3
      %v737 = vsel %vm720, %v736, %v735
      %v738 = vrot.slane %v689, 2
      %v739 = vsel %vm723, %v738, %v737
      %v740 = vrot.slane %v690, 1
      %v741 = vsel %vm726, %v740, %v739
      %vm744 = vcmask 261120
      %745 = vst.msk [vmem:[%s170] sm:$0xff] %vm744, %v727
      %746 = vst.msk [vmem:[%s170 + $0x8] sm:$0xff] %vm744, %v741
      %p747 = scmp.lt.s32.totalorder %s14, 1
      %s748 = scalar_select %p747, %s14, 1
      %s749 = smul.addr %s748, 2
      %s750 = smul.addr %s749, 8
      %s751 = scalar_lea.vmem %s3, %s750
      // Predicated region
      $region33: #{forward.5} parent=31 // pred_check
        %p752 = pneg %p100
      $region34: #{forward.5} parent=31 // pred_check_branch
        %754 = sbr.rel (%p752) target = $region36
      $region35: #{forward.5} parent=31 // pred_region
        _
      $region36: #{forward.5} parent=31 // pred_fallthru
        _
    $region32: #{forward.5} parent=5 // pred_fallthru
      _
    %p755 = scmp.le.s32.totalorder 2, %s9
    // Predicated region
    $region37: #{forward.5} parent=5 // pred_check
      %p756 = pneg %p755
    $region38: #{forward.5} parent=5 // pred_check_branch
      %758 = sbr.rel (%p756) target = $region40
    $region39: #{forward.5} parent=5 // pred_region
      %s759 = ssub.s32 %s9, 2
      // Predicated region
      $region41: #{forward.5} parent=39 // pred_check
        %p760 = pneg %p106
      $region42: #{forward.5} parent=39 // pred_check_branch
        %762 = sbr.rel (%p760) target = $region44
      $region43: #{forward.5} parent=39 // pred_region
        %p763 = scmp.lt.s32.totalorder %s15, 1
        %s764 = scalar_select %p763, %s15, 1
        %s765 = smul.addr %s764, 2
        %s766 = smul.addr %s765, 8
        %s767 = scalar_lea.vmem %s3, %s766
      $region44: #{forward.5} parent=39 // pred_fallthru
        _
    $region40: #{forward.5} parent=5 // pred_fallthru
      _
  $region6: #{forward.5} parent=0 // loop_footer
    %s13 = sadd.s32 1, %s9
  $region7: #{forward.5} parent=0 // loop_footer_branch
    %8 = sbr.rel target = $region3
  $region8: #{forward.5} parent=0 // loop_exit
    _

// kernel: forward.7
$region0: #{forward.7}
  #allocation0 [shape = 'u32[]', space=smem, size = 0x4, offset = 0x4, fixed_abs, tag = 'smem constant byte address 0x4 - core index']
  #allocation1 [shape = 'u32[72,128]{1,0:T(1,128)}', space=vmem, size = 0x9000, scoped, tag = 'internal scratch']
  %s0 = inlined_call_operand.vmem [shape: f32[2,1024], index: 0, kind: input, shape index: {}]
  %s1 = inlined_call_operand.vmem [shape: f32[1024,64], index: 1, kind: input, shape index: {}]
  %s2 = inlined_call_operand.vmem [shape: f32[1,64], index: 2, kind: input, shape index: {}]
  %s3 = inlined_call_operand.hbm [shape: f32[2,64], index: 3, kind: output, shape index: {}]
  %s4 = sld [smem:[#allocation0]]
  $region22: #{forward.7} parent=0
    _
  %s6 = ssub.s32 1, %s4
  %s7 = scalar_select 0, %s6, %s4
  $region1: #{forward.7} parent=0
    #allocation2 [shape = 'u8[1024]{0}', space=vmem, size = 0x400, scoped, tag = 'output window, operand 0, single buffered']
    #allocation3 [shape = 's32[1]{0}', space=sflag, size = 0x4, scoped, tag = 'scoped memory for forward.7']
    %8 = vsyncpa [#allocation3], 0
    // Predicated region
    $region2: #{forward.7} parent=1 // pred_check
      _
    $region3: #{forward.7} parent=1 // pred_check_branch
      %10 = sbr.rel (0) target = $region5
    $region4: #{forward.7} parent=1 // pred_region
      _
    $region5: #{forward.7} parent=1 // pred_fallthru
      _
    // Predicated region
    $region6: #{forward.7} parent=1 // pred_check
      _
    $region7: #{forward.7} parent=1 // pred_check_branch
      %12 = sbr.rel (0) target = $region9
    $region8: #{forward.7} parent=1 // pred_region
      _
    $region9: #{forward.7} parent=1 // pred_fallthru
      _
    // Predicated region
    $region10: #{forward.7} parent=1 // pred_check
      _
    $region11: #{forward.7} parent=1 // pred_check_branch
      %14 = sbr.rel (0) target = $region13
    $region12: #{forward.7} parent=1 // pred_region
      _
    $region13: #{forward.7} parent=1 // pred_fallthru
      _
    %v15 = vld [vmem:[%s0] sm:$0xff]
    %v16 = vld [vmem:[%s0 + $0x8] sm:$0xff]
    %v17 = vld [vmem:[%s1] sm:$0xff]
    %v18 = vld [vmem:[%s1 + $0x8] sm:$0xff]
    %v19 = vld [vmem:[%s1 + $0x10] sm:$0xff]
    %v20 = vld [vmem:[%s1 + $0x18] sm:$0xff]
    %v21 = vld [vmem:[%s1 + $0x20] sm:$0xff]
    %v22 = vld [vmem:[%s1 + $0x28] sm:$0xff]
    %v23 = vld [vmem:[%s1 + $0x30] sm:$0xff]
    %v24 = vld [vmem:[%s1 + $0x38] sm:$0xff]
    %v25 = vld [vmem:[%s1 + $0x40] sm:$0xff]
    %v26 = vld [vmem:[%s1 + $0x48] sm:$0xff]
    %v27 = vld [vmem:[%s1 + $0x50] sm:$0xff]
    %v28 = vld [vmem:[%s1 + $0x58] sm:$0xff]
    %v29 = vld [vmem:[%s1 + $0x60] sm:$0xff]
    %v30 = vld [vmem:[%s1 + $0x68] sm:$0xff]
    %v31 = vld [vmem:[%s1 + $0x70] sm:$0xff]
    %v32 = vld [vmem:[%s1 + $0x78] sm:$0xff]
    %v33 = vld [vmem:[%s1 + $0x80] sm:$0xff]
    %v34 = vld [vmem:[%s1 + $0x88] sm:$0xff]
    %v35 = vld [vmem:[%s1 + $0x90] sm:$0xff]
    %v36 = vld [vmem:[%s1 + $0x98] sm:$0xff]
    %v37 = vld [vmem:[%s1 + $0xa0] sm:$0xff]
    %v38 = vld [vmem:[%s1 + $0xa8] sm:$0xff]
    %v39 = vld [vmem:[%s1 + $0xb0] sm:$0xff]
    %v40 = vld [vmem:[%s1 + $0xb8] sm:$0xff]
    %v41 = vld [vmem:[%s1 + $0xc0] sm:$0xff]
    %v42 = vld [vmem:[%s1 + $0xc8] sm:$0xff]
    %v43 = vld [vmem:[%s1 + $0xd0] sm:$0xff]
    %v44 = vld [vmem:[%s1 + $0xd8] sm:$0xff]
    %v45 = vld [vmem:[%s1 + $0xe0] sm:$0xff]
    %v46 = vld [vmem:[%s1 + $0xe8] sm:$0xff]
    %v47 = vld [vmem:[%s1 + $0xf0] sm:$0xff]
    %v48 = vld [vmem:[%s1 + $0xf8] sm:$0xff]
    %v49 = vld [vmem:[%s1 + $0x100] sm:$0xff]
    %v50 = vld [vmem:[%s1 + $0x108] sm:$0xff]
    %v51 = vld [vmem:[%s1 + $0x110] sm:$0xff]
    %v52 = vld [vmem:[%s1 + $0x118] sm:$0xff]
    %v53 = vld [vmem:[%s1 + $0x120] sm:$0xff]
    %v54 = vld [vmem:[%s1 + $0x128] sm:$0xff]
    %v55 = vld [vmem:[%s1 + $0x130] sm:$0xff]
    %v56 = vld [vmem:[%s1 + $0x138] sm:$0xff]
    %v57 = vld [vmem:[%s1 + $0x140] sm:$0xff]
    %v58 = vld [vmem:[%s1 + $0x148] sm:$0xff]
    %v59 = vld [vmem:[%s1 + $0x150] sm:$0xff]
    %v60 = vld [vmem:[%s1 + $0x158] sm:$0xff]
    %v61 = vld [vmem:[%s1 + $0x160] sm:$0xff]
    %v62 = vld [vmem:[%s1 + $0x168] sm:$0xff]
    %v63 = vld [vmem:[%s1 + $0x170] sm:$0xff]
    %v64 = vld [vmem:[%s1 + $0x178] sm:$0xff]
    %v65 = vld [vmem:[%s1 + $0x180] sm:$0xff]
    %v66 = vld [vmem:[%s1 + $0x188] sm:$0xff]
    %v67 = vld [vmem:[%s1 + $0x190] sm:$0xff]
    %v68 = vld [vmem:[%s1 + $0x198] sm:$0xff]
    %v69 = vld [vmem:[%s1 + $0x1a0] sm:$0xff]
    %v70 = vld [vmem:[%s1 + $0x1a8] sm:$0xff]
    %v71 = vld [vmem:[%s1 + $0x1b0] sm:$0xff]
    %v72 = vld [vmem:[%s1 + $0x1b8] sm:$0xff]
    %v73 = vld [vmem:[%s1 + $0x1c0] sm:$0xff]
    %v74 = vld [vmem:[%s1 + $0x1c8] sm:$0xff]
    %v75 = vld [vmem:[%s1 + $0x1d0] sm:$0xff]
    %v76 = vld [vmem:[%s1 + $0x1d8] sm:$0xff]
    %v77 = vld [vmem:[%s1 + $0x1e0] sm:$0xff]
    %v78 = vld [vmem:[%s1 + $0x1e8] sm:$0xff]
    %v79 = vld [vmem:[%s1 + $0x1f0] sm:$0xff]
    %v80 = vld [vmem:[%s1 + $0x1f8] sm:$0xff]
    %v81 = vld [vmem:[%s1 + $0x200] sm:$0xff]
    %v82 = vld [vmem:[%s1 + $0x208] sm:$0xff]
    %v83 = vld [vmem:[%s1 + $0x210] sm:$0xff]
    %v84 = vld [vmem:[%s1 + $0x218] sm:$0xff]
    %v85 = vld [vmem:[%s1 + $0x220] sm:$0xff]
    %v86 = vld [vmem:[%s1 + $0x228] sm:$0xff]
    %v87 = vld [vmem:[%s1 + $0x230] sm:$0xff]
    %v88 = vld [vmem:[%s1 + $0x238] sm:$0xff]
    %v89 = vld [vmem:[%s1 + $0x240] sm:$0xff]
    %v90 = vld [vmem:[%s1 + $0x248] sm:$0xff]
    %v91 = vld [vmem:[%s1 + $0x250] sm:$0xff]
    %v92 = vld [vmem:[%s1 + $0x258] sm:$0xff]
    %v93 = vld [vmem:[%s1 + $0x260] sm:$0xff]
    %v94 = vld [vmem:[%s1 + $0x268] sm:$0xff]
    %v95 = vld [vmem:[%s1 + $0x270] sm:$0xff]
    %v96 = vld [vmem:[%s1 + $0x278] sm:$0xff]
    %v97 = vld [vmem:[%s1 + $0x280] sm:$0xff]
    %v98 = vld [vmem:[%s1 + $0x288] sm:$0xff]
    %v99 = vld [vmem:[%s1 + $0x290] sm:$0xff]
    %v100 = vld [vmem:[%s1 + $0x298] sm:$0xff]
    %v101 = vld [vmem:[%s1 + $0x2a0] sm:$0xff]
    %v102 = vld [vmem:[%s1 + $0x2a8] sm:$0xff]
    %v103 = vld [vmem:[%s1 + $0x2b0] sm:$0xff]
    %v104 = vld [vmem:[%s1 + $0x2b8] sm:$0xff]
    %v105 = vld [vmem:[%s1 + $0x2c0] sm:$0xff]
    %v106 = vld [vmem:[%s1 + $0x2c8] sm:$0xff]
    %v107 = vld [vmem:[%s1 + $0x2d0] sm:$0xff]
    %v108 = vld [vmem:[%s1 + $0x2d8] sm:$0xff]
    %v109 = vld [vmem:[%s1 + $0x2e0] sm:$0xff]
    %v110 = vld [vmem:[%s1 + $0x2e8] sm:$0xff]
    %v111 = vld [vmem:[%s1 + $0x2f0] sm:$0xff]
    %v112 = vld [vmem:[%s1 + $0x2f8] sm:$0xff]
    %v113 = vld [vmem:[%s1 + $0x300] sm:$0xff]
    %v114 = vld [vmem:[%s1 + $0x308] sm:$0xff]
    %v115 = vld [vmem:[%s1 + $0x310] sm:$0xff]
    %v116 = vld [vmem:[%s1 + $0x318] sm:$0xff]
    %v117 = vld [vmem:[%s1 + $0x320] sm:$0xff]
    %v118 = vld [vmem:[%s1 + $0x328] sm:$0xff]
    %v119 = vld [vmem:[%s1 + $0x330] sm:$0xff]
    %v120 = vld [vmem:[%s1 + $0x338] sm:$0xff]
    %v121 = vld [vmem:[%s1 + $0x340] sm:$0xff]
    %v122 = vld [vmem:[%s1 + $0x348] sm:$0xff]
    %v123 = vld [vmem:[%s1 + $0x350] sm:$0xff]
    %v124 = vld [vmem:[%s1 + $0x358] sm:$0xff]
    %v125 = vld [vmem:[%s1 + $0x360] sm:$0xff]
    %v126 = vld [vmem:[%s1 + $0x368] sm:$0xff]
    %v127 = vld [vmem:[%s1 + $0x370] sm:$0xff]
    %v128 = vld [vmem:[%s1 + $0x378] sm:$0xff]
    %v129 = vld [vmem:[%s1 + $0x380] sm:$0xff]
    %v130 = vld [vmem:[%s1 + $0x388] sm:$0xff]
    %v131 = vld [vmem:[%s1 + $0x390] sm:$0xff]
    %v132 = vld [vmem:[%s1 + $0x398] sm:$0xff]
    %v133 = vld [vmem:[%s1 + $0x3a0] sm:$0xff]
    %v134 = vld [vmem:[%s1 + $0x3a8] sm:$0xff]
    %v135 = vld [vmem:[%s1 + $0x3b0] sm:$0xff]
    %v136 = vld [vmem:[%s1 + $0x3b8] sm:$0xff]
    %v137 = vld [vmem:[%s1 + $0x3c0] sm:$0xff]
    %v138 = vld [vmem:[%s1 + $0x3c8] sm:$0xff]
    %v139 = vld [vmem:[%s1 + $0x3d0] sm:$0xff]
    %v140 = vld [vmem:[%s1 + $0x3d8] sm:$0xff]
    %v141 = vld [vmem:[%s1 + $0x3e0] sm:$0xff]
    %v142 = vld [vmem:[%s1 + $0x3e8] sm:$0xff]
    %v143 = vld [vmem:[%s1 + $0x3f0] sm:$0xff]
    %v144 = vld [vmem:[%s1 + $0x3f8] sm:$0xff]
    %v145 = vld [vmem:[%s2] sm:$0x1]
    %v147 = vperm.slane %v145, 0
    %151 = vst [vmem:[#allocation1] ss:$4 sm:$0xff] %v15
    %s152 = scalar_lea.vmem [#allocation1], 32
    %153 = vst [vmem:[%s152] ss:$4 sm:$0xff] %v16
    %v154 = vld.sshfl [vmem:[#allocation1] sm:$0xff pattern:$0x73625140]
    %v155 = vld.sshfl [vmem:[#allocation1 + $0x8] sm:$0xff pattern:$0x73625140]
    %v156 = vld.sshfl [vmem:[#allocation1 + $0x10] sm:$0xff pattern:$0x73625140]
    %v157 = vld.sshfl [vmem:[#allocation1 + $0x18] sm:$0xff pattern:$0x73625140]
    %v158 = vld.sshfl [vmem:[#allocation1 + $0x20] sm:$0xff pattern:$0x73625140]
    %v159 = vld.sshfl [vmem:[#allocation1 + $0x28] sm:$0xff pattern:$0x73625140]
    %v160 = vld.sshfl [vmem:[#allocation1 + $0x30] sm:$0xff pattern:$0x73625140]
    %v161 = vld.sshfl [vmem:[#allocation1 + $0x38] sm:$0xff pattern:$0x73625140]
    %170 = vmatpush.msra.mxu0 %v32
    %171 = vmatpush.msra.mxu0 %v31
    %172 = vmatpush.msra.mxu0 %v30
    %173 = vmatpush.msra.mxu0 %v29
    %174 = vmatpush.msra.mxu0 %v28
    %175 = vmatpush.msra.mxu0 %v27
    %176 = vmatpush.msra.mxu0 %v26
    %177 = vmatpush.msra.mxu0 %v25
    %178 = vmatpush.msra.mxu0 %v24
    %179 = vmatpush.msra.mxu0 %v23
    %180 = vmatpush.msra.mxu0 %v22
    %181 = vmatpush.msra.mxu0 %v21
    %182 = vmatpush.msra.mxu0 %v20
    %183 = vmatpush.msra.mxu0 %v19
    %184 = vmatpush.msra.mxu0 %v18
    %185 = vmatpush.msra.mxu0 %v17
    %186 = vmatmul.f32.gmra.mxu0 %v154
    %v187 = vpop.f32.mrf.mxu0
    %v188 = vadd.f32 %v147, %v187
    %189 = vdwg.mxu0
    %190 = vmatpush.msra.mxu0 %v48
    %191 = vmatpush.msra.mxu0 %v47
    %192 = vmatpush.msra.mxu0 %v46
    %193 = vmatpush.msra.mxu0 %v45
    %194 = vmatpush.msra.mxu0 %v44
    %195 = vmatpush.msra.mxu0 %v43
    %196 = vmatpush.msra.mxu0 %v42
    %197 = vmatpush.msra.mxu0 %v41
    %198 = vmatpush.msra.mxu0 %v40
    %199 = vmatpush.msra.mxu0 %v39
    %200 = vmatpush.msra.mxu0 %v38
    %201 = vmatpush.msra.mxu0 %v37
    %202 = vmatpush.msra.mxu0 %v36
    %203 = vmatpush.msra.mxu0 %v35
    %204 = vmatpush.msra.mxu0 %v34
    %205 = vmatpush.msra.mxu0 %v33
    %206 = vmatmul.f32.gmra.mxu0 %v155
    %v207 = vpop.f32.mrf.mxu0
    %v208 = vadd.f32 %v188, %v207
    %209 = vdwg.mxu0
    %210 = vmatpush.msra.mxu0 %v64
    %211 = vmatpush.msra.mxu0 %v63
    %212 = vmatpush.msra.mxu0 %v62
    %213 = vmatpush.msra.mxu0 %v61
    %214 = vmatpush.msra.mxu0 %v60
    %215 = vmatpush.msra.mxu0 %v59
    %216 = vmatpush.msra.mxu0 %v58
    %217 = vmatpush.msra.mxu0 %v57
    %218 = vmatpush.msra.mxu0 %v56
    %219 = vmatpush.msra.mxu0 %v55
    %220 = vmatpush.msra.mxu0 %v54
    %221 = vmatpush.msra.mxu0 %v53
    %222 = vmatpush.msra.mxu0 %v52
    %223 = vmatpush.msra.mxu0 %v51
    %224 = vmatpush.msra.mxu0 %v50
    %225 = vmatpush.msra.mxu0 %v49
    %226 = vmatmul.f32.gmra.mxu0 %v156
    %v227 = vpop.f32.mrf.mxu0
    %v228 = vadd.f32 %v208, %v227
    %229 = vdwg.mxu0
    %230 = vmatpush.msra.mxu0 %v80
    %231 = vmatpush.msra.mxu0 %v79
    %232 = vmatpush.msra.mxu0 %v78
    %233 = vmatpush.msra.mxu0 %v77
    %234 = vmatpush.msra.mxu0 %v76
    %235 = vmatpush.msra.mxu0 %v75
    %236 = vmatpush.msra.mxu0 %v74
    %237 = vmatpush.msra.mxu0 %v73
    %238 = vmatpush.msra.mxu0 %v72
    %239 = vmatpush.msra.mxu0 %v71
    %240 = vmatpush.msra.mxu0 %v70
    %241 = vmatpush.msra.mxu0 %v69
    %242 = vmatpush.msra.mxu0 %v68
    %243 = vmatpush.msra.mxu0 %v67
    %244 = vmatpush.msra.mxu0 %v66
    %245 = vmatpush.msra.mxu0 %v65
    %246 = vmatmul.f32.gmra.mxu0 %v157
    %v247 = vpop.f32.mrf.mxu0
    %v248 = vadd.f32 %v228, %v247
    %249 = vdwg.mxu0
    %250 = vmatpush.msra.mxu0 %v96
    %251 = vmatpush.msra.mxu0 %v95
    %252 = vmatpush.msra.mxu0 %v94
    %253 = vmatpush.msra.mxu0 %v93
    %254 = vmatpush.msra.mxu0 %v92
    %255 = vmatpush.msra.mxu0 %v91
    %256 = vmatpush.msra.mxu0 %v90
    %257 = vmatpush.msra.mxu0 %v89
    %258 = vmatpush.msra.mxu0 %v88
    %259 = vmatpush.msra.mxu0 %v87
    %260 = vmatpush.msra.mxu0 %v86
    %261 = vmatpush.msra.mxu0 %v85
    %262 = vmatpush.msra.mxu0 %v84
    %263 = vmatpush.msra.mxu0 %v83
    %264 = vmatpush.msra.mxu0 %v82
    %265 = vmatpush.msra.mxu0 %v81
    %266 = vmatmul.f32.gmra.mxu0 %v158
    %v267 = vpop.f32.mrf.mxu0
    %v268 = vadd.f32 %v248, %v267
    %269 = vdwg.mxu0
    %270 = vmatpush.msra.mxu0 %v112
    %271 = vmatpush.msra.mxu0 %v111
    %272 = vmatpush.msra.mxu0 %v110
    %273 = vmatpush.msra.mxu0 %v109
    %274 = vmatpush.msra.mxu0 %v108
    %275 = vmatpush.msra.mxu0 %v107
    %276 = vmatpush.msra.mxu0 %v106
    %277 = vmatpush.msra.mxu0 %v105
    %278 = vmatpush.msra.mxu0 %v104
    %279 = vmatpush.msra.mxu0 %v103
    %280 = vmatpush.msra.mxu0 %v102
    %281 = vmatpush.msra.mxu0 %v101
    %282 = vmatpush.msra.mxu0 %v100
    %283 = vmatpush.msra.mxu0 %v99
    %284 = vmatpush.msra.mxu0 %v98
    %285 = vmatpush.msra.mxu0 %v97
    %286 = vmatmul.f32.gmra.mxu0 %v159
    %v287 = vpop.f32.mrf.mxu0
    %v288 = vadd.f32 %v268, %v287
    %289 = vdwg.mxu0
    %290 = vmatpush.msra.mxu0 %v128
    %291 = vmatpush.msra.mxu0 %v127
    %292 = vmatpush.msra.mxu0 %v126
    %293 = vmatpush.msra.mxu0 %v125
    %294 = vmatpush.msra.mxu0 %v124
    %295 = vmatpush.msra.mxu0 %v123
    %296 = vmatpush.msra.mxu0 %v122
    %297 = vmatpush.msra.mxu0 %v121
    %298 = vmatpush.msra.mxu0 %v120
    %299 = vmatpush.msra.mxu0 %v119
    %300 = vmatpush.msra.mxu0 %v118
    %301 = vmatpush.msra.mxu0 %v117
    %302 = vmatpush.msra.mxu0 %v116
    %303 = vmatpush.msra.mxu0 %v115
    %304 = vmatpush.msra.mxu0 %v114
    %305 = vmatpush.msra.mxu0 %v113
    %306 = vmatmul.f32.gmra.mxu0 %v160
    %v307 = vpop.f32.mrf.mxu0
    %v308 = vadd.f32 %v288, %v307
    %309 = vdwg.mxu0
    %310 = vmatpush.msra.mxu0 %v144
    %311 = vmatpush.msra.mxu0 %v143
    %312 = vmatpush.msra.mxu0 %v142
    %313 = vmatpush.msra.mxu0 %v141
    %314 = vmatpush.msra.mxu0 %v140
    %315 = vmatpush.msra.mxu0 %v139
    %316 = vmatpush.msra.mxu0 %v138
    %317 = vmatpush.msra.mxu0 %v137
    %318 = vmatpush.msra.mxu0 %v136
    %319 = vmatpush.msra.mxu0 %v135
    %320 = vmatpush.msra.mxu0 %v134
    %321 = vmatpush.msra.mxu0 %v133
    %322 = vmatpush.msra.mxu0 %v132
    %323 = vmatpush.msra.mxu0 %v131
    %324 = vmatpush.msra.mxu0 %v130
    %325 = vmatpush.msra.mxu0 %v129
    %326 = vmatmul.f32.gmra.mxu0 %v161
    %v327 = vpop.f32.mrf.mxu0
    %v328 = vadd.f32 %v308, %v327
    %329 = vdwg.mxu0
    %vm330 = vcmask 517120
    %331 = vst.msk [vmem:[#allocation2] sm:$0x3] %vm330, %v328
    // Predicated region
    $region14: #{forward.7} parent=1 // pred_check
      _
    $region15: #{forward.7} parent=1 // pred_check_branch
      %333 = sbr.rel (0) target = $region17
    $region16: #{forward.7} parent=1 // pred_region
      %335 = vsyncadd [#allocation3], 0
      %s337 = sshll.u32 [#allocation2], 4
      %s338 = int_to_ptr.vmem [resolvable:$true] %s337
      %s339 = sshll.u32 %s3, 4
      %s340 = int_to_ptr.hbm [resolvable:$true] %s339
      %342 = dma.vmem_to_hbm [thread:$0]  %s338, 32, %s340, [#allocation3]
    $region17: #{forward.7} parent=1 // pred_fallthru
      _
    // Predicated region
    $region18: #{forward.7} parent=1 // pred_check
      _
    $region19: #{forward.7} parent=1 // pred_check_branch
      %344 = sbr.rel (0) target = $region21
    $region20: #{forward.7} parent=1 // pred_region
      %346 = dma.done [#allocation3], 32
    $region21: #{forward.7} parent=1 // pred_fallthru
      _
    %347 = vsyncpa [#allocation3], 1

</llo_original>
